<compile_context>
chip_gen: v5e
topology: v5e:2x2
jax: 0.10.0
libtpu: 0.0.40
codegen_flags: <defaults>
</compile_context>

<pallas_src>
import jax
import jax.numpy as jnp
import numpy as np
from jax.experimental import pallas as pl
from jax.experimental.pallas import tpu as pltpu

_SUBLANE = 8


# --------------------------- fused forward kernel ----------------------------
def _make_fused_gru_kernel(S, Bp, I, H, O, L):
    """Kernel closure for a static problem size (Bp = batch padded to sublanes).

    Ref layout (positional):
      inputs : x2d (S*Bp, I)  time-major rows [t*Bp + b]
               h0  (L, Bp, H)
               per layer l: w_ih_t (in_l, 3H),
                            b_i    (1, 3H)   [= b_ih + (b_hh_r | b_hh_z | 0)],
                            w_hh_t (H, 3H),
                            b_hn   (1, H)    [= b_hh_n]
               w_out_t (H, O), b_out (1, O)
      output : out (Bp, O)
      scratch: seq (S*Bp, H)  current layer's hidden sequence (VMEM resident)
    """

    def kernel(*refs):
        x_ref, h0_ref = refs[0], refs[1]
        layer_refs = refs[2:2 + 4 * L]
        wout_ref = refs[2 + 4 * L]
        bout_ref = refs[3 + 4 * L]
        out_ref = refs[4 + 4 * L]
        seq_ref = refs[5 + 4 * L]

        h = None
        for l in range(L):
            # Hoist per-layer parameter loads out of the unrolled recurrence.
            wih = layer_refs[4 * l + 0][...]   # (in_l, 3H)
            bi = layer_refs[4 * l + 1][...]    # (1, 3H)
            whh = layer_refs[4 * l + 2][...]   # (H, 3H)
            bhn = layer_refs[4 * l + 3][...]   # (1, H)

            # Hoisted input projection: ONE (S*Bp, in_l) x (in_l, 3H) GEMM per
            # layer instead of S tiny matmuls inside the serial recurrence.
            inp = x_ref[...] if l == 0 else seq_ref[...]
            gi_all = jnp.dot(inp, wih, preferred_element_type=jnp.float32) + bi

            # Serial recurrence, fully unrolled; all slices are static and
            # sublane-aligned (Bp is a multiple of 8).  Only h @ W_hh remains
            # on the sequential critical path.
            h = h0_ref[l]                                    # (Bp, H)
            for t in range(S):
                gi = gi_all[t * Bp:(t + 1) * Bp]             # (Bp, 3H)
                gh = jnp.dot(h, whh, preferred_element_type=jnp.float32)
                r = jax.nn.sigmoid(gi[:, 0:H] + gh[:, 0:H])
                z = jax.nn.sigmoid(gi[:, H:2 * H] + gh[:, H:2 * H])
                n = jnp.tanh(gi[:, 2 * H:3 * H]
                             + r * (gh[:, 2 * H:3 * H] + bhn))
                h = (1.0 - z) * n + z * h
                if l < L - 1:                                # feed next layer
                    seq_ref[t * Bp:(t + 1) * Bp, :] = h

        # Linear head on the last timestep of the last layer (== out[:, -1, :]).
        out_ref[...] = (jnp.dot(h, wout_ref[...],
                                preferred_element_type=jnp.float32)
                        + bout_ref[...]).astype(out_ref.dtype)

    return kernel


def reference_model_forward(params, x, init_h=None):
    """x: (batch, seq, input) like the PyTorch batch_first GRU. Returns (batch, output)."""
    B, S, I = x.shape
    L = len(params["gru"])
    H = params["gru"][0]["w_hh_t"].shape[0]
    O = params["out_w_t"].shape[-1]
    if init_h is None:
        init_h = jnp.zeros((L, B, H), dtype=jnp.float32)
    init_h = init_h.astype(jnp.float32)

    # Pad the batch to a sublane multiple so every in-kernel row slice / store
    # is a full, aligned (8, lanes) tile.  Padded rows are zeros and inert.
    Bp = ((B + _SUBLANE - 1) // _SUBLANE) * _SUBLANE
    x_t = jnp.transpose(x, (1, 0, 2)).astype(jnp.float32)    # (S, B, I) time-major
    if Bp != B:
        x_t = jnp.pad(x_t, ((0, 0), (0, Bp - B), (0, 0)))
        init_h = jnp.pad(init_h, ((0, 0), (0, Bp - B), (0, 0)))
    x2d = x_t.reshape(S * Bp, I)                             # row index = t*Bp + b

    args = [x2d, init_h]
    for lp in params["gru"]:
        # Fold the r/z hidden biases into the hoisted projection bias so only
        # the n-gate hidden bias remains inside the recurrence.
        b_i = lp["b_ih"].at[:, :2 * H].add(lp["b_hh"][:, :2 * H])
        args += [lp["w_ih_t"], b_i, lp["w_hh_t"], lp["b_hh"][:, 2 * H:]]
    args += [params["out_w_t"], params["out_b"]]

    kernel = _make_fused_gru_kernel(S, Bp, I, H, O, L)
    out = pl.pallas_call(
        kernel,
        out_shape=jax.ShapeDtypeStruct((Bp, O), jnp.float32),
        scratch_shapes=[pltpu.VMEM((S * Bp, H), jnp.float32)],
    )(*args)
    return out[:B]


# --------------------------- pure-JAX reference -------------------------------
def _gru_cell_ref(x_t, h_prev, w_ih_t, w_hh_t, b_ih, b_hh):
    H = h_prev.shape[-1]
    gi = x_t @ w_ih_t + b_ih
    gh = h_prev @ w_hh_t + b_hh
    r = jax.nn.sigmoid(gi[:, :H] + gh[:, :H])
    z = jax.nn.sigmoid(gi[:, H:2 * H] + gh[:, H:2 * H])
    n = jnp.tanh(gi[:, 2 * H:] + r * gh[:, 2 * H:])
    return (1.0 - z) * n + z * h_prev


def reference_model_forward_jax(params, x, init_h=None):
    B, S, I = x.shape
    L = len(params["gru"])
    H = params["gru"][0]["w_hh_t"].shape[0]
    if init_h is None:
        init_h = jnp.zeros((L, B, H), dtype=jnp.float32)
    seq = jnp.transpose(x, (1, 0, 2)).astype(jnp.float32)
    for li, lp in enumerate(params["gru"]):
        h = init_h[li]
        outs = []
        for t in range(S):
            h = _gru_cell_ref(seq[t], h, lp["w_ih_t"], lp["w_hh_t"],
                              lp["b_ih"], lp["b_hh"])
            outs.append(h)
        seq = jnp.stack(outs, axis=0)
    return seq[-1] @ params["out_w_t"] + params["out_b"]


# ------------------------------- param init -----------------------------------
def init_params(key, input_size, hidden_size, output_size, rnn_layers=2):
    params = {"gru": []}
    scale = 1.0 / np.sqrt(hidden_size)
    for layer in range(rnn_layers):
        in_feat = input_size if layer == 0 else hidden_size
        key, k1, k2, k3, k4 = jax.random.split(key, 5)
        # PyTorch stores (3H, in) / (3H, H); pre-transpose for the kernel.
        w_ih = jax.random.uniform(k1, (3 * hidden_size, in_feat),
                                  minval=-scale, maxval=scale, dtype=jnp.float32)
        w_hh = jax.random.uniform(k2, (3 * hidden_size, hidden_size),
                                  minval=-scale, maxval=scale, dtype=jnp.float32)
        b_ih = jax.random.uniform(k3, (1, 3 * hidden_size),
                                  minval=-scale, maxval=scale, dtype=jnp.float32)
        b_hh = jax.random.uniform(k4, (1, 3 * hidden_size),
                                  minval=-scale, maxval=scale, dtype=jnp.float32)
        params["gru"].append({"w_ih_t": w_ih.T, "w_hh_t": w_hh.T,
                              "b_ih": b_ih, "b_hh": b_hh})
    key, k5, k6 = jax.random.split(key, 3)
    oscale = 1.0 / np.sqrt(hidden_size)
    out_w = jax.random.uniform(k5, (output_size, hidden_size),
                               minval=-oscale, maxval=oscale, dtype=jnp.float32)
    out_b = jax.random.uniform(k6, (1, output_size),
                               minval=-oscale, maxval=oscale, dtype=jnp.float32)
    params["out_w_t"] = out_w.T
    params["out_b"] = out_b
    return params


if __name__ == "__main__":
    key = jax.random.PRNGKey(0)
    batch, seq, input_size, hidden_size, output_size = 2, 8, 16, 32, 8

    kp, kx = jax.random.split(key)
    params = init_params(kp, input_size, hidden_size, output_size, rnn_layers=2)
    x = jax.random.normal(kx, (batch, seq, input_size), dtype=jnp.float32)

    out = reference_model_forward(params, x)          # fused Pallas kernel
    out = jax.block_until_ready(out)

    ref = reference_model_forward_jax(params, x)      # pure-JAX check
    ref = jax.block_until_ready(ref)

    np.testing.assert_allclose(np.asarray(out), np.asarray(ref),
                               rtol=1e-5, atol=1e-5)
    assert out.shape == (batch, output_size)
    print("KERNEL_OK")
</pallas_src>

<mosaic_0001>
module attributes {stable_mosaic.version = 11 : i64} {
  func.func @kernel(%arg0: memref<64x16xf32, #tpu.memory_space<vmem>>, %arg1: memref<2x8x32xf32, #tpu.memory_space<vmem>>, %arg2: memref<16x96xf32, #tpu.memory_space<vmem>>, %arg3: memref<1x96xf32, #tpu.memory_space<vmem>>, %arg4: memref<32x96xf32, #tpu.memory_space<vmem>>, %arg5: memref<1x32xf32, #tpu.memory_space<vmem>>, %arg6: memref<32x96xf32, #tpu.memory_space<vmem>>, %arg7: memref<1x96xf32, #tpu.memory_space<vmem>>, %arg8: memref<32x96xf32, #tpu.memory_space<vmem>>, %arg9: memref<1x32xf32, #tpu.memory_space<vmem>>, %arg10: memref<32x8xf32, #tpu.memory_space<vmem>>, %arg11: memref<1x8xf32, #tpu.memory_space<vmem>>, %arg12: memref<8x8xf32, #tpu.memory_space<vmem>>, %arg13: memref<64x32xf32, #tpu.memory_space<vmem>>) attributes {dimension_semantics = [], scalar_prefetch = 0 : i64, scratch_operands = 1 : i64, tpu.core_type = #tpu.core_type<tc>} {
    %c0 = arith.constant 0 : index
    %c0_0 = arith.constant 0 : index
    %0 = vector.load %arg2[%c0, %c0_0] : memref<16x96xf32, #tpu.memory_space<vmem>>, vector<16x96xf32>
    %c0_1 = arith.constant 0 : index
    %c0_2 = arith.constant 0 : index
    %1 = vector.load %arg3[%c0_1, %c0_2] : memref<1x96xf32, #tpu.memory_space<vmem>>, vector<1x96xf32>
    %c0_3 = arith.constant 0 : index
    %c0_4 = arith.constant 0 : index
    %2 = vector.load %arg4[%c0_3, %c0_4] : memref<32x96xf32, #tpu.memory_space<vmem>>, vector<32x96xf32>
    %c0_5 = arith.constant 0 : index
    %c0_6 = arith.constant 0 : index
    %3 = vector.load %arg5[%c0_5, %c0_6] : memref<1x32xf32, #tpu.memory_space<vmem>>, vector<1x32xf32>
    %c0_7 = arith.constant 0 : index
    %c0_8 = arith.constant 0 : index
    %4 = vector.load %arg0[%c0_7, %c0_8] : memref<64x16xf32, #tpu.memory_space<vmem>>, vector<64x16xf32>
    %cst = arith.constant dense<0.000000e+00> : vector<64x96xf32>
    %5 = tpu.matmul %4, %0, %cst {dimension_numbers = #tpu.dot_dimension_numbers<[1], [0], [0], [1], [0, 0, 1, 1], [], []>} : vector<64x16xf32>, vector<16x96xf32>, vector<64x96xf32> -> vector<64x96xf32>
    %6 = vector.broadcast %1 : vector<1x96xf32> to vector<64x96xf32>
    %7 = arith.addf %5, %6 : vector<64x96xf32>
    %c0_9 = arith.constant 0 : index
    %c0_10 = arith.constant 0 : index
    %c0_11 = arith.constant 0 : index
    %8 = vector.load %arg1[%c0_9, %c0_10, %c0_11] : memref<2x8x32xf32, #tpu.memory_space<vmem>>, vector<1x8x32xf32>
    %9 = vector.shape_cast %8 : vector<1x8x32xf32> to vector<8x32xf32>
    %10 = vector.extract_strided_slice %7 {offsets = [0, 0], sizes = [8, 96], strides = [1, 1]} : vector<64x96xf32> to vector<8x96xf32>
    %cst_12 = arith.constant dense<0.000000e+00> : vector<8x96xf32>
    %11 = tpu.matmul %9, %2, %cst_12 {dimension_numbers = #tpu.dot_dimension_numbers<[1], [0], [0], [1], [0, 0, 1, 1], [], []>} : vector<8x32xf32>, vector<32x96xf32>, vector<8x96xf32> -> vector<8x96xf32>
    %12 = vector.extract_strided_slice %10 {offsets = [0, 0], sizes = [8, 32], strides = [1, 1]} : vector<8x96xf32> to vector<8x32xf32>
    %13 = vector.extract_strided_slice %11 {offsets = [0, 0], sizes = [8, 32], strides = [1, 1]} : vector<8x96xf32> to vector<8x32xf32>
    %14 = arith.addf %12, %13 : vector<8x32xf32>
    %15 = arith.negf %14 : vector<8x32xf32>
    %16 = math.exp %15 : vector<8x32xf32>
    %cst_13 = arith.constant 1.000000e+00 : f32
    %17 = vector.broadcast %cst_13 : f32 to vector<8x32xf32>
    %18 = arith.addf %17, %16 : vector<8x32xf32>
    %19 = arith.divf %17, %18 : vector<8x32xf32>
    %20 = vector.extract_strided_slice %10 {offsets = [0, 32], sizes = [8, 32], strides = [1, 1]} : vector<8x96xf32> to vector<8x32xf32>
    %21 = vector.extract_strided_slice %11 {offsets = [0, 32], sizes = [8, 32], strides = [1, 1]} : vector<8x96xf32> to vector<8x32xf32>
    %22 = arith.addf %20, %21 : vector<8x32xf32>
    %23 = arith.negf %22 : vector<8x32xf32>
    %24 = math.exp %23 : vector<8x32xf32>
    %cst_14 = arith.constant 1.000000e+00 : f32
    %25 = vector.broadcast %cst_14 : f32 to vector<8x32xf32>
    %26 = arith.addf %25, %24 : vector<8x32xf32>
    %27 = arith.divf %25, %26 : vector<8x32xf32>
    %28 = vector.extract_strided_slice %10 {offsets = [0, 64], sizes = [8, 32], strides = [1, 1]} : vector<8x96xf32> to vector<8x32xf32>
    %29 = vector.extract_strided_slice %11 {offsets = [0, 64], sizes = [8, 32], strides = [1, 1]} : vector<8x96xf32> to vector<8x32xf32>
    %30 = vector.broadcast %3 : vector<1x32xf32> to vector<8x32xf32>
    %31 = arith.addf %29, %30 : vector<8x32xf32>
    %32 = arith.mulf %19, %31 : vector<8x32xf32>
    %33 = arith.addf %28, %32 : vector<8x32xf32>
    %34 = math.tanh %33 : vector<8x32xf32>
    %cst_15 = arith.constant 1.000000e+00 : f32
    %35 = vector.broadcast %cst_15 : f32 to vector<8x32xf32>
    %36 = arith.subf %35, %27 : vector<8x32xf32>
    %37 = arith.mulf %36, %34 : vector<8x32xf32>
    %38 = arith.mulf %27, %9 : vector<8x32xf32>
    %39 = arith.addf %37, %38 : vector<8x32xf32>
    %c0_16 = arith.constant 0 : index
    %c0_17 = arith.constant 0 : index
    %40 = vector.load %arg13[%c0_16, %c0_17] : memref<64x32xf32, #tpu.memory_space<vmem>>, vector<8x32xf32>
    tpu.vector_store %arg13[%c0_16, %c0_17], %39 {strides = array<i32>} : memref<64x32xf32, #tpu.memory_space<vmem>>, vector<8x32xf32>,
    %41 = vector.extract_strided_slice %7 {offsets = [8, 0], sizes = [8, 96], strides = [1, 1]} : vector<64x96xf32> to vector<8x96xf32>
    %cst_18 = arith.constant dense<0.000000e+00> : vector<8x96xf32>
    %42 = tpu.matmul %39, %2, %cst_18 {dimension_numbers = #tpu.dot_dimension_numbers<[1], [0], [0], [1], [0, 0, 1, 1], [], []>} : vector<8x32xf32>, vector<32x96xf32>, vector<8x96xf32> -> vector<8x96xf32>
    %43 = vector.extract_strided_slice %41 {offsets = [0, 0], sizes = [8, 32], strides = [1, 1]} : vector<8x96xf32> to vector<8x32xf32>
    %44 = vector.extract_strided_slice %42 {offsets = [0, 0], sizes = [8, 32], strides = [1, 1]} : vector<8x96xf32> to vector<8x32xf32>
    %45 = arith.addf %43, %44 : vector<8x32xf32>
    %46 = arith.negf %45 : vector<8x32xf32>
    %47 = math.exp %46 : vector<8x32xf32>
    %cst_19 = arith.constant 1.000000e+00 : f32
    %48 = vector.broadcast %cst_19 : f32 to vector<8x32xf32>
    %49 = arith.addf %48, %47 : vector<8x32xf32>
    %50 = arith.divf %48, %49 : vector<8x32xf32>
    %51 = vector.extract_strided_slice %41 {offsets = [0, 32], sizes = [8, 32], strides = [1, 1]} : vector<8x96xf32> to vector<8x32xf32>
    %52 = vector.extract_strided_slice %42 {offsets = [0, 32], sizes = [8, 32], strides = [1, 1]} : vector<8x96xf32> to vector<8x32xf32>
    %53 = arith.addf %51, %52 : vector<8x32xf32>
    %54 = arith.negf %53 : vector<8x32xf32>
    %55 = math.exp %54 : vector<8x32xf32>
    %cst_20 = arith.constant 1.000000e+00 : f32
    %56 = vector.broadcast %cst_20 : f32 to vector<8x32xf32>
    %57 = arith.addf %56, %55 : vector<8x32xf32>
    %58 = arith.divf %56, %57 : vector<8x32xf32>
    %59 = vector.extract_strided_slice %41 {offsets = [0, 64], sizes = [8, 32], strides = [1, 1]} : vector<8x96xf32> to vector<8x32xf32>
    %60 = vector.extract_strided_slice %42 {offsets = [0, 64], sizes = [8, 32], strides = [1, 1]} : vector<8x96xf32> to vector<8x32xf32>
    %61 = vector.broadcast %3 : vector<1x32xf32> to vector<8x32xf32>
    %62 = arith.addf %60, %61 : vector<8x32xf32>
    %63 = arith.mulf %50, %62 : vector<8x32xf32>
    %64 = arith.addf %59, %63 : vector<8x32xf32>
    %65 = math.tanh %64 : vector<8x32xf32>
    %cst_21 = arith.constant 1.000000e+00 : f32
    %66 = vector.broadcast %cst_21 : f32 to vector<8x32xf32>
    %67 = arith.subf %66, %58 : vector<8x32xf32>
    %68 = arith.mulf %67, %65 : vector<8x32xf32>
    %69 = arith.mulf %58, %39 : vector<8x32xf32>
    %70 = arith.addf %68, %69 : vector<8x32xf32>
    %c8 = arith.constant 8 : index
    %c0_22 = arith.constant 0 : index
    %71 = vector.load %arg13[%c8, %c0_22] : memref<64x32xf32, #tpu.memory_space<vmem>>, vector<8x32xf32>
    tpu.vector_store %arg13[%c8, %c0_22], %70 {strides = array<i32>} : memref<64x32xf32, #tpu.memory_space<vmem>>, vector<8x32xf32>,
    %72 = vector.extract_strided_slice %7 {offsets = [16, 0], sizes = [8, 96], strides = [1, 1]} : vector<64x96xf32> to vector<8x96xf32>
    %cst_23 = arith.constant dense<0.000000e+00> : vector<8x96xf32>
    %73 = tpu.matmul %70, %2, %cst_23 {dimension_numbers = #tpu.dot_dimension_numbers<[1], [0], [0], [1], [0, 0, 1, 1], [], []>} : vector<8x32xf32>, vector<32x96xf32>, vector<8x96xf32> -> vector<8x96xf32>
    %74 = vector.extract_strided_slice %72 {offsets = [0, 0], sizes = [8, 32], strides = [1, 1]} : vector<8x96xf32> to vector<8x32xf32>
    %75 = vector.extract_strided_slice %73 {offsets = [0, 0], sizes = [8, 32], strides = [1, 1]} : vector<8x96xf32> to vector<8x32xf32>
    %76 = arith.addf %74, %75 : vector<8x32xf32>
    %77 = arith.negf %76 : vector<8x32xf32>
    %78 = math.exp %77 : vector<8x32xf32>
    %cst_24 = arith.constant 1.000000e+00 : f32
    %79 = vector.broadcast %cst_24 : f32 to vector<8x32xf32>
    %80 = arith.addf %79, %78 : vector<8x32xf32>
    %81 = arith.divf %79, %80 : vector<8x32xf32>
    %82 = vector.extract_strided_slice %72 {offsets = [0, 32], sizes = [8, 32], strides = [1, 1]} : vector<8x96xf32> to vector<8x32xf32>
    %83 = vector.extract_strided_slice %73 {offsets = [0, 32], sizes = [8, 32], strides = [1, 1]} : vector<8x96xf32> to vector<8x32xf32>
    %84 = arith.addf %82, %83 : vector<8x32xf32>
    %85 = arith.negf %84 : vector<8x32xf32>
    %86 = math.exp %85 : vector<8x32xf32>
    %cst_25 = arith.constant 1.000000e+00 : f32
    %87 = vector.broadcast %cst_25 : f32 to vector<8x32xf32>
    %88 = arith.addf %87, %86 : vector<8x32xf32>
    %89 = arith.divf %87, %88 : vector<8x32xf32>
    %90 = vector.extract_strided_slice %72 {offsets = [0, 64], sizes = [8, 32], strides = [1, 1]} : vector<8x96xf32> to vector<8x32xf32>
    %91 = vector.extract_strided_slice %73 {offsets = [0, 64], sizes = [8, 32], strides = [1, 1]} : vector<8x96xf32> to vector<8x32xf32>
    %92 = vector.broadcast %3 : vector<1x32xf32> to vector<8x32xf32>
    %93 = arith.addf %91, %92 : vector<8x32xf32>
    %94 = arith.mulf %81, %93 : vector<8x32xf32>
    %95 = arith.addf %90, %94 : vector<8x32xf32>
    %96 = math.tanh %95 : vector<8x32xf32>
    %cst_26 = arith.constant 1.000000e+00 : f32
    %97 = vector.broadcast %cst_26 : f32 to vector<8x32xf32>
    %98 = arith.subf %97, %89 : vector<8x32xf32>
    %99 = arith.mulf %98, %96 : vector<8x32xf32>
    %100 = arith.mulf %89, %70 : vector<8x32xf32>
    %101 = arith.addf %99, %100 : vector<8x32xf32>
    %c16 = arith.constant 16 : index
    %c0_27 = arith.constant 0 : index
    %102 = vector.load %arg13[%c16, %c0_27] : memref<64x32xf32, #tpu.memory_space<vmem>>, vector<8x32xf32>
    tpu.vector_store %arg13[%c16, %c0_27], %101 {strides = array<i32>} : memref<64x32xf32, #tpu.memory_space<vmem>>, vector<8x32xf32>,
    %103 = vector.extract_strided_slice %7 {offsets = [24, 0], sizes = [8, 96], strides = [1, 1]} : vector<64x96xf32> to vector<8x96xf32>
    %cst_28 = arith.constant dense<0.000000e+00> : vector<8x96xf32>
    %104 = tpu.matmul %101, %2, %cst_28 {dimension_numbers = #tpu.dot_dimension_numbers<[1], [0], [0], [1], [0, 0, 1, 1], [], []>} : vector<8x32xf32>, vector<32x96xf32>, vector<8x96xf32> -> vector<8x96xf32>
    %105 = vector.extract_strided_slice %103 {offsets = [0, 0], sizes = [8, 32], strides = [1, 1]} : vector<8x96xf32> to vector<8x32xf32>
    %106 = vector.extract_strided_slice %104 {offsets = [0, 0], sizes = [8, 32], strides = [1, 1]} : vector<8x96xf32> to vector<8x32xf32>
    %107 = arith.addf %105, %106 : vector<8x32xf32>
    %108 = arith.negf %107 : vector<8x32xf32>
    %109 = math.exp %108 : vector<8x32xf32>
    %cst_29 = arith.constant 1.000000e+00 : f32
    %110 = vector.broadcast %cst_29 : f32 to vector<8x32xf32>
    %111 = arith.addf %110, %109 : vector<8x32xf32>
    %112 = arith.divf %110, %111 : vector<8x32xf32>
    %113 = vector.extract_strided_slice %103 {offsets = [0, 32], sizes = [8, 32], strides = [1, 1]} : vector<8x96xf32> to vector<8x32xf32>
    %114 = vector.extract_strided_slice %104 {offsets = [0, 32], sizes = [8, 32], strides = [1, 1]} : vector<8x96xf32> to vector<8x32xf32>
    %115 = arith.addf %113, %114 : vector<8x32xf32>
    %116 = arith.negf %115 : vector<8x32xf32>
    %117 = math.exp %116 : vector<8x32xf32>
    %cst_30 = arith.constant 1.000000e+00 : f32
    %118 = vector.broadcast %cst_30 : f32 to vector<8x32xf32>
    %119 = arith.addf %118, %117 : vector<8x32xf32>
    %120 = arith.divf %118, %119 : vector<8x32xf32>
    %121 = vector.extract_strided_slice %103 {offsets = [0, 64], sizes = [8, 32], strides = [1, 1]} : vector<8x96xf32> to vector<8x32xf32>
    %122 = vector.extract_strided_slice %104 {offsets = [0, 64], sizes = [8, 32], strides = [1, 1]} : vector<8x96xf32> to vector<8x32xf32>
    %123 = vector.broadcast %3 : vector<1x32xf32> to vector<8x32xf32>
    %124 = arith.addf %122, %123 : vector<8x32xf32>
    %125 = arith.mulf %112, %124 : vector<8x32xf32>
    %126 = arith.addf %121, %125 : vector<8x32xf32>
    %127 = math.tanh %126 : vector<8x32xf32>
    %cst_31 = arith.constant 1.000000e+00 : f32
    %128 = vector.broadcast %cst_31 : f32 to vector<8x32xf32>
    %129 = arith.subf %128, %120 : vector<8x32xf32>
    %130 = arith.mulf %129, %127 : vector<8x32xf32>
    %131 = arith.mulf %120, %101 : vector<8x32xf32>
    %132 = arith.addf %130, %131 : vector<8x32xf32>
    %c24 = arith.constant 24 : index
    %c0_32 = arith.constant 0 : index
    %133 = vector.load %arg13[%c24, %c0_32] : memref<64x32xf32, #tpu.memory_space<vmem>>, vector<8x32xf32>
    tpu.vector_store %arg13[%c24, %c0_32], %132 {strides = array<i32>} : memref<64x32xf32, #tpu.memory_space<vmem>>, vector<8x32xf32>,
    %134 = vector.extract_strided_slice %7 {offsets = [32, 0], sizes = [8, 96], strides = [1, 1]} : vector<64x96xf32> to vector<8x96xf32>
    %cst_33 = arith.constant dense<0.000000e+00> : vector<8x96xf32>
    %135 = tpu.matmul %132, %2, %cst_33 {dimension_numbers = #tpu.dot_dimension_numbers<[1], [0], [0], [1], [0, 0, 1, 1], [], []>} : vector<8x32xf32>, vector<32x96xf32>, vector<8x96xf32> -> vector<8x96xf32>
    %136 = vector.extract_strided_slice %134 {offsets = [0, 0], sizes = [8, 32], strides = [1, 1]} : vector<8x96xf32> to vector<8x32xf32>
    %137 = vector.extract_strided_slice %135 {offsets = [0, 0], sizes = [8, 32], strides = [1, 1]} : vector<8x96xf32> to vector<8x32xf32>
    %138 = arith.addf %136, %137 : vector<8x32xf32>
    %139 = arith.negf %138 : vector<8x32xf32>
    %140 = math.exp %139 : vector<8x32xf32>
    %cst_34 = arith.constant 1.000000e+00 : f32
    %141 = vector.broadcast %cst_34 : f32 to vector<8x32xf32>
    %142 = arith.addf %141, %140 : vector<8x32xf32>
    %143 = arith.divf %141, %142 : vector<8x32xf32>
    %144 = vector.extract_strided_slice %134 {offsets = [0, 32], sizes = [8, 32], strides = [1, 1]} : vector<8x96xf32> to vector<8x32xf32>
    %145 = vector.extract_strided_slice %135 {offsets = [0, 32], sizes = [8, 32], strides = [1, 1]} : vector<8x96xf32> to vector<8x32xf32>
    %146 = arith.addf %144, %145 : vector<8x32xf32>
    %147 = arith.negf %146 : vector<8x32xf32>
    %148 = math.exp %147 : vector<8x32xf32>
    %cst_35 = arith.constant 1.000000e+00 : f32
    %149 = vector.broadcast %cst_35 : f32 to vector<8x32xf32>
    %150 = arith.addf %149, %148 : vector<8x32xf32>
    %151 = arith.divf %149, %150 : vector<8x32xf32>
    %152 = vector.extract_strided_slice %134 {offsets = [0, 64], sizes = [8, 32], strides = [1, 1]} : vector<8x96xf32> to vector<8x32xf32>
    %153 = vector.extract_strided_slice %135 {offsets = [0, 64], sizes = [8, 32], strides = [1, 1]} : vector<8x96xf32> to vector<8x32xf32>
    %154 = vector.broadcast %3 : vector<1x32xf32> to vector<8x32xf32>
    %155 = arith.addf %153, %154 : vector<8x32xf32>
    %156 = arith.mulf %143, %155 : vector<8x32xf32>
    %157 = arith.addf %152, %156 : vector<8x32xf32>
    %158 = math.tanh %157 : vector<8x32xf32>
    %cst_36 = arith.constant 1.000000e+00 : f32
    %159 = vector.broadcast %cst_36 : f32 to vector<8x32xf32>
    %160 = arith.subf %159, %151 : vector<8x32xf32>
    %161 = arith.mulf %160, %158 : vector<8x32xf32>
    %162 = arith.mulf %151, %132 : vector<8x32xf32>
    %163 = arith.addf %161, %162 : vector<8x32xf32>
    %c32 = arith.constant 32 : index
    %c0_37 = arith.constant 0 : index
    %164 = vector.load %arg13[%c32, %c0_37] : memref<64x32xf32, #tpu.memory_space<vmem>>, vector<8x32xf32>
    tpu.vector_store %arg13[%c32, %c0_37], %163 {strides = array<i32>} : memref<64x32xf32, #tpu.memory_space<vmem>>, vector<8x32xf32>,
    %165 = vector.extract_strided_slice %7 {offsets = [40, 0], sizes = [8, 96], strides = [1, 1]} : vector<64x96xf32> to vector<8x96xf32>
    %cst_38 = arith.constant dense<0.000000e+00> : vector<8x96xf32>
    %166 = tpu.matmul %163, %2, %cst_38 {dimension_numbers = #tpu.dot_dimension_numbers<[1], [0], [0], [1], [0, 0, 1, 1], [], []>} : vector<8x32xf32>, vector<32x96xf32>, vector<8x96xf32> -> vector<8x96xf32>
    %167 = vector.extract_strided_slice %165 {offsets = [0, 0], sizes = [8, 32], strides = [1, 1]} : vector<8x96xf32> to vector<8x32xf32>
    %168 = vector.extract_strided_slice %166 {offsets = [0, 0], sizes = [8, 32], strides = [1, 1]} : vector<8x96xf32> to vector<8x32xf32>
    %169 = arith.addf %167, %168 : vector<8x32xf32>
    %170 = arith.negf %169 : vector<8x32xf32>
    %171 = math.exp %170 : vector<8x32xf32>
    %cst_39 = arith.constant 1.000000e+00 : f32
    %172 = vector.broadcast %cst_39 : f32 to vector<8x32xf32>
    %173 = arith.addf %172, %171 : vector<8x32xf32>
    %174 = arith.divf %172, %173 : vector<8x32xf32>
    %175 = vector.extract_strided_slice %165 {offsets = [0, 32], sizes = [8, 32], strides = [1, 1]} : vector<8x96xf32> to vector<8x32xf32>
    %176 = vector.extract_strided_slice %166 {offsets = [0, 32], sizes = [8, 32], strides = [1, 1]} : vector<8x96xf32> to vector<8x32xf32>
    %177 = arith.addf %175, %176 : vector<8x32xf32>
    %178 = arith.negf %177 : vector<8x32xf32>
    %179 = math.exp %178 : vector<8x32xf32>
    %cst_40 = arith.constant 1.000000e+00 : f32
    %180 = vector.broadcast %cst_40 : f32 to vector<8x32xf32>
    %181 = arith.addf %180, %179 : vector<8x32xf32>
    %182 = arith.divf %180, %181 : vector<8x32xf32>
    %183 = vector.extract_strided_slice %165 {offsets = [0, 64], sizes = [8, 32], strides = [1, 1]} : vector<8x96xf32> to vector<8x32xf32>
    %184 = vector.extract_strided_slice %166 {offsets = [0, 64], sizes = [8, 32], strides = [1, 1]} : vector<8x96xf32> to vector<8x32xf32>
    %185 = vector.broadcast %3 : vector<1x32xf32> to vector<8x32xf32>
    %186 = arith.addf %184, %185 : vector<8x32xf32>
    %187 = arith.mulf %174, %186 : vector<8x32xf32>
    %188 = arith.addf %183, %187 : vector<8x32xf32>
    %189 = math.tanh %188 : vector<8x32xf32>
    %cst_41 = arith.constant 1.000000e+00 : f32
    %190 = vector.broadcast %cst_41 : f32 to vector<8x32xf32>
    %191 = arith.subf %190, %182 : vector<8x32xf32>
    %192 = arith.mulf %191, %189 : vector<8x32xf32>
    %193 = arith.mulf %182, %163 : vector<8x32xf32>
    %194 = arith.addf %192, %193 : vector<8x32xf32>
    %c40 = arith.constant 40 : index
    %c0_42 = arith.constant 0 : index
    %195 = vector.load %arg13[%c40, %c0_42] : memref<64x32xf32, #tpu.memory_space<vmem>>, vector<8x32xf32>
    tpu.vector_store %arg13[%c40, %c0_42], %194 {strides = array<i32>} : memref<64x32xf32, #tpu.memory_space<vmem>>, vector<8x32xf32>,
    %196 = vector.extract_strided_slice %7 {offsets = [48, 0], sizes = [8, 96], strides = [1, 1]} : vector<64x96xf32> to vector<8x96xf32>
    %cst_43 = arith.constant dense<0.000000e+00> : vector<8x96xf32>
    %197 = tpu.matmul %194, %2, %cst_43 {dimension_numbers = #tpu.dot_dimension_numbers<[1], [0], [0], [1], [0, 0, 1, 1], [], []>} : vector<8x32xf32>, vector<32x96xf32>, vector<8x96xf32> -> vector<8x96xf32>
    %198 = vector.extract_strided_slice %196 {offsets = [0, 0], sizes = [8, 32], strides = [1, 1]} : vector<8x96xf32> to vector<8x32xf32>
    %199 = vector.extract_strided_slice %197 {offsets = [0, 0], sizes = [8, 32], strides = [1, 1]} : vector<8x96xf32> to vector<8x32xf32>
    %200 = arith.addf %198, %199 : vector<8x32xf32>
    %201 = arith.negf %200 : vector<8x32xf32>
    %202 = math.exp %201 : vector<8x32xf32>
    %cst_44 = arith.constant 1.000000e+00 : f32
    %203 = vector.broadcast %cst_44 : f32 to vector<8x32xf32>
    %204 = arith.addf %203, %202 : vector<8x32xf32>
    %205 = arith.divf %203, %204 : vector<8x32xf32>
    %206 = vector.extract_strided_slice %196 {offsets = [0, 32], sizes = [8, 32], strides = [1, 1]} : vector<8x96xf32> to vector<8x32xf32>
    %207 = vector.extract_strided_slice %197 {offsets = [0, 32], sizes = [8, 32], strides = [1, 1]} : vector<8x96xf32> to vector<8x32xf32>
    %208 = arith.addf %206, %207 : vector<8x32xf32>
    %209 = arith.negf %208 : vector<8x32xf32>
    %210 = math.exp %209 : vector<8x32xf32>
    %cst_45 = arith.constant 1.000000e+00 : f32
    %211 = vector.broadcast %cst_45 : f32 to vector<8x32xf32>
    %212 = arith.addf %211, %210 : vector<8x32xf32>
    %213 = arith.divf %211, %212 : vector<8x32xf32>
    %214 = vector.extract_strided_slice %196 {offsets = [0, 64], sizes = [8, 32], strides = [1, 1]} : vector<8x96xf32> to vector<8x32xf32>
    %215 = vector.extract_strided_slice %197 {offsets = [0, 64], sizes = [8, 32], strides = [1, 1]} : vector<8x96xf32> to vector<8x32xf32>
    %216 = vector.broadcast %3 : vector<1x32xf32> to vector<8x32xf32>
    %217 = arith.addf %215, %216 : vector<8x32xf32>
    %218 = arith.mulf %205, %217 : vector<8x32xf32>
    %219 = arith.addf %214, %218 : vector<8x32xf32>
    %220 = math.tanh %219 : vector<8x32xf32>
    %cst_46 = arith.constant 1.000000e+00 : f32
    %221 = vector.broadcast %cst_46 : f32 to vector<8x32xf32>
    %222 = arith.subf %221, %213 : vector<8x32xf32>
    %223 = arith.mulf %222, %220 : vector<8x32xf32>
    %224 = arith.mulf %213, %194 : vector<8x32xf32>
    %225 = arith.addf %223, %224 : vector<8x32xf32>
    %c48 = arith.constant 48 : index
    %c0_47 = arith.constant 0 : index
    %226 = vector.load %arg13[%c48, %c0_47] : memref<64x32xf32, #tpu.memory_space<vmem>>, vector<8x32xf32>
    tpu.vector_store %arg13[%c48, %c0_47], %225 {strides = array<i32>} : memref<64x32xf32, #tpu.memory_space<vmem>>, vector<8x32xf32>,
    %227 = vector.extract_strided_slice %7 {offsets = [56, 0], sizes = [8, 96], strides = [1, 1]} : vector<64x96xf32> to vector<8x96xf32>
    %cst_48 = arith.constant dense<0.000000e+00> : vector<8x96xf32>
    %228 = tpu.matmul %225, %2, %cst_48 {dimension_numbers = #tpu.dot_dimension_numbers<[1], [0], [0], [1], [0, 0, 1, 1], [], []>} : vector<8x32xf32>, vector<32x96xf32>, vector<8x96xf32> -> vector<8x96xf32>
    %229 = vector.extract_strided_slice %227 {offsets = [0, 0], sizes = [8, 32], strides = [1, 1]} : vector<8x96xf32> to vector<8x32xf32>
    %230 = vector.extract_strided_slice %228 {offsets = [0, 0], sizes = [8, 32], strides = [1, 1]} : vector<8x96xf32> to vector<8x32xf32>
    %231 = arith.addf %229, %230 : vector<8x32xf32>
    %232 = arith.negf %231 : vector<8x32xf32>
    %233 = math.exp %232 : vector<8x32xf32>
    %cst_49 = arith.constant 1.000000e+00 : f32
    %234 = vector.broadcast %cst_49 : f32 to vector<8x32xf32>
    %235 = arith.addf %234, %233 : vector<8x32xf32>
    %236 = arith.divf %234, %235 : vector<8x32xf32>
    %237 = vector.extract_strided_slice %227 {offsets = [0, 32], sizes = [8, 32], strides = [1, 1]} : vector<8x96xf32> to vector<8x32xf32>
    %238 = vector.extract_strided_slice %228 {offsets = [0, 32], sizes = [8, 32], strides = [1, 1]} : vector<8x96xf32> to vector<8x32xf32>
    %239 = arith.addf %237, %238 : vector<8x32xf32>
    %240 = arith.negf %239 : vector<8x32xf32>
    %241 = math.exp %240 : vector<8x32xf32>
    %cst_50 = arith.constant 1.000000e+00 : f32
    %242 = vector.broadcast %cst_50 : f32 to vector<8x32xf32>
    %243 = arith.addf %242, %241 : vector<8x32xf32>
    %244 = arith.divf %242, %243 : vector<8x32xf32>
    %245 = vector.extract_strided_slice %227 {offsets = [0, 64], sizes = [8, 32], strides = [1, 1]} : vector<8x96xf32> to vector<8x32xf32>
    %246 = vector.extract_strided_slice %228 {offsets = [0, 64], sizes = [8, 32], strides = [1, 1]} : vector<8x96xf32> to vector<8x32xf32>
    %247 = vector.broadcast %3 : vector<1x32xf32> to vector<8x32xf32>
    %248 = arith.addf %246, %247 : vector<8x32xf32>
    %249 = arith.mulf %236, %248 : vector<8x32xf32>
    %250 = arith.addf %245, %249 : vector<8x32xf32>
    %251 = math.tanh %250 : vector<8x32xf32>
    %cst_51 = arith.constant 1.000000e+00 : f32
    %252 = vector.broadcast %cst_51 : f32 to vector<8x32xf32>
    %253 = arith.subf %252, %244 : vector<8x32xf32>
    %254 = arith.mulf %253, %251 : vector<8x32xf32>
    %255 = arith.mulf %244, %225 : vector<8x32xf32>
    %256 = arith.addf %254, %255 : vector<8x32xf32>
    %c56 = arith.constant 56 : index
    %c0_52 = arith.constant 0 : index
    %257 = vector.load %arg13[%c56, %c0_52] : memref<64x32xf32, #tpu.memory_space<vmem>>, vector<8x32xf32>
    tpu.vector_store %arg13[%c56, %c0_52], %256 {strides = array<i32>} : memref<64x32xf32, #tpu.memory_space<vmem>>, vector<8x32xf32>,
    %c0_53 = arith.constant 0 : index
    %c0_54 = arith.constant 0 : index
    %258 = vector.load %arg6[%c0_53, %c0_54] : memref<32x96xf32, #tpu.memory_space<vmem>>, vector<32x96xf32>
    %c0_55 = arith.constant 0 : index
    %c0_56 = arith.constant 0 : index
    %259 = vector.load %arg7[%c0_55, %c0_56] : memref<1x96xf32, #tpu.memory_space<vmem>>, vector<1x96xf32>
    %c0_57 = arith.constant 0 : index
    %c0_58 = arith.constant 0 : index
    %260 = vector.load %arg8[%c0_57, %c0_58] : memref<32x96xf32, #tpu.memory_space<vmem>>, vector<32x96xf32>
    %c0_59 = arith.constant 0 : index
    %c0_60 = arith.constant 0 : index
    %261 = vector.load %arg9[%c0_59, %c0_60] : memref<1x32xf32, #tpu.memory_space<vmem>>, vector<1x32xf32>
    %c0_61 = arith.constant 0 : index
    %c0_62 = arith.constant 0 : index
    %262 = vector.load %arg13[%c0_61, %c0_62] : memref<64x32xf32, #tpu.memory_space<vmem>>, vector<64x32xf32>
    %cst_63 = arith.constant dense<0.000000e+00> : vector<64x96xf32>
    %263 = tpu.matmul %262, %258, %cst_63 {dimension_numbers = #tpu.dot_dimension_numbers<[1], [0], [0], [1], [0, 0, 1, 1], [], []>} : vector<64x32xf32>, vector<32x96xf32>, vector<64x96xf32> -> vector<64x96xf32>
    %264 = vector.broadcast %259 : vector<1x96xf32> to vector<64x96xf32>
    %265 = arith.addf %263, %264 : vector<64x96xf32>
    %c1 = arith.constant 1 : index
    %c0_64 = arith.constant 0 : index
    %c0_65 = arith.constant 0 : index
    %266 = vector.load %arg1[%c1, %c0_64, %c0_65] : memref<2x8x32xf32, #tpu.memory_space<vmem>>, vector<1x8x32xf32>
    %267 = vector.shape_cast %266 : vector<1x8x32xf32> to vector<8x32xf32>
    %268 = vector.extract_strided_slice %265 {offsets = [0, 0], sizes = [8, 96], strides = [1, 1]} : vector<64x96xf32> to vector<8x96xf32>
    %cst_66 = arith.constant dense<0.000000e+00> : vector<8x96xf32>
    %269 = tpu.matmul %267, %260, %cst_66 {dimension_numbers = #tpu.dot_dimension_numbers<[1], [0], [0], [1], [0, 0, 1, 1], [], []>} : vector<8x32xf32>, vector<32x96xf32>, vector<8x96xf32> -> vector<8x96xf32>
    %270 = vector.extract_strided_slice %268 {offsets = [0, 0], sizes = [8, 32], strides = [1, 1]} : vector<8x96xf32> to vector<8x32xf32>
    %271 = vector.extract_strided_slice %269 {offsets = [0, 0], sizes = [8, 32], strides = [1, 1]} : vector<8x96xf32> to vector<8x32xf32>
    %272 = arith.addf %270, %271 : vector<8x32xf32>
    %273 = arith.negf %272 : vector<8x32xf32>
    %274 = math.exp %273 : vector<8x32xf32>
    %cst_67 = arith.constant 1.000000e+00 : f32
    %275 = vector.broadcast %cst_67 : f32 to vector<8x32xf32>
    %276 = arith.addf %275, %274 : vector<8x32xf32>
    %277 = arith.divf %275, %276 : vector<8x32xf32>
    %278 = vector.extract_strided_slice %268 {offsets = [0, 32], sizes = [8, 32], strides = [1, 1]} : vector<8x96xf32> to vector<8x32xf32>
    %279 = vector.extract_strided_slice %269 {offsets = [0, 32], sizes = [8, 32], strides = [1, 1]} : vector<8x96xf32> to vector<8x32xf32>
    %280 = arith.addf %278, %279 : vector<8x32xf32>
    %281 = arith.negf %280 : vector<8x32xf32>
    %282 = math.exp %281 : vector<8x32xf32>
    %cst_68 = arith.constant 1.000000e+00 : f32
    %283 = vector.broadcast %cst_68 : f32 to vector<8x32xf32>
    %284 = arith.addf %283, %282 : vector<8x32xf32>
    %285 = arith.divf %283, %284 : vector<8x32xf32>
    %286 = vector.extract_strided_slice %268 {offsets = [0, 64], sizes = [8, 32], strides = [1, 1]} : vector<8x96xf32> to vector<8x32xf32>
    %287 = vector.extract_strided_slice %269 {offsets = [0, 64], sizes = [8, 32], strides = [1, 1]} : vector<8x96xf32> to vector<8x32xf32>
    %288 = vector.broadcast %261 : vector<1x32xf32> to vector<8x32xf32>
    %289 = arith.addf %287, %288 : vector<8x32xf32>
    %290 = arith.mulf %277, %289 : vector<8x32xf32>
    %291 = arith.addf %286, %290 : vector<8x32xf32>
    %292 = math.tanh %291 : vector<8x32xf32>
    %cst_69 = arith.constant 1.000000e+00 : f32
    %293 = vector.broadcast %cst_69 : f32 to vector<8x32xf32>
    %294 = arith.subf %293, %285 : vector<8x32xf32>
    %295 = arith.mulf %294, %292 : vector<8x32xf32>
    %296 = arith.mulf %285, %267 : vector<8x32xf32>
    %297 = arith.addf %295, %296 : vector<8x32xf32>
    %298 = vector.extract_strided_slice %265 {offsets = [8, 0], sizes = [8, 96], strides = [1, 1]} : vector<64x96xf32> to vector<8x96xf32>
    %cst_70 = arith.constant dense<0.000000e+00> : vector<8x96xf32>
    %299 = tpu.matmul %297, %260, %cst_70 {dimension_numbers = #tpu.dot_dimension_numbers<[1], [0], [0], [1], [0, 0, 1, 1], [], []>} : vector<8x32xf32>, vector<32x96xf32>, vector<8x96xf32> -> vector<8x96xf32>
    %300 = vector.extract_strided_slice %298 {offsets = [0, 0], sizes = [8, 32], strides = [1, 1]} : vector<8x96xf32> to vector<8x32xf32>
    %301 = vector.extract_strided_slice %299 {offsets = [0, 0], sizes = [8, 32], strides = [1, 1]} : vector<8x96xf32> to vector<8x32xf32>
    %302 = arith.addf %300, %301 : vector<8x32xf32>
    %303 = arith.negf %302 : vector<8x32xf32>
    %304 = math.exp %303 : vector<8x32xf32>
    %cst_71 = arith.constant 1.000000e+00 : f32
    %305 = vector.broadcast %cst_71 : f32 to vector<8x32xf32>
    %306 = arith.addf %305, %304 : vector<8x32xf32>
    %307 = arith.divf %305, %306 : vector<8x32xf32>
    %308 = vector.extract_strided_slice %298 {offsets = [0, 32], sizes = [8, 32], strides = [1, 1]} : vector<8x96xf32> to vector<8x32xf32>
    %309 = vector.extract_strided_slice %299 {offsets = [0, 32], sizes = [8, 32], strides = [1, 1]} : vector<8x96xf32> to vector<8x32xf32>
    %310 = arith.addf %308, %309 : vector<8x32xf32>
    %311 = arith.negf %310 : vector<8x32xf32>
    %312 = math.exp %311 : vector<8x32xf32>
    %cst_72 = arith.constant 1.000000e+00 : f32
    %313 = vector.broadcast %cst_72 : f32 to vector<8x32xf32>
    %314 = arith.addf %313, %312 : vector<8x32xf32>
    %315 = arith.divf %313, %314 : vector<8x32xf32>
    %316 = vector.extract_strided_slice %298 {offsets = [0, 64], sizes = [8, 32], strides = [1, 1]} : vector<8x96xf32> to vector<8x32xf32>
    %317 = vector.extract_strided_slice %299 {offsets = [0, 64], sizes = [8, 32], strides = [1, 1]} : vector<8x96xf32> to vector<8x32xf32>
    %318 = vector.broadcast %261 : vector<1x32xf32> to vector<8x32xf32>
    %319 = arith.addf %317, %318 : vector<8x32xf32>
    %320 = arith.mulf %307, %319 : vector<8x32xf32>
    %321 = arith.addf %316, %320 : vector<8x32xf32>
    %322 = math.tanh %321 : vector<8x32xf32>
    %cst_73 = arith.constant 1.000000e+00 : f32
    %323 = vector.broadcast %cst_73 : f32 to vector<8x32xf32>
    %324 = arith.subf %323, %315 : vector<8x32xf32>
    %325 = arith.mulf %324, %322 : vector<8x32xf32>
    %326 = arith.mulf %315, %297 : vector<8x32xf32>
    %327 = arith.addf %325, %326 : vector<8x32xf32>
    %328 = vector.extract_strided_slice %265 {offsets = [16, 0], sizes = [8, 96], strides = [1, 1]} : vector<64x96xf32> to vector<8x96xf32>
    %cst_74 = arith.constant dense<0.000000e+00> : vector<8x96xf32>
    %329 = tpu.matmul %327, %260, %cst_74 {dimension_numbers = #tpu.dot_dimension_numbers<[1], [0], [0], [1], [0, 0, 1, 1], [], []>} : vector<8x32xf32>, vector<32x96xf32>, vector<8x96xf32> -> vector<8x96xf32>
    %330 = vector.extract_strided_slice %328 {offsets = [0, 0], sizes = [8, 32], strides = [1, 1]} : vector<8x96xf32> to vector<8x32xf32>
    %331 = vector.extract_strided_slice %329 {offsets = [0, 0], sizes = [8, 32], strides = [1, 1]} : vector<8x96xf32> to vector<8x32xf32>
    %332 = arith.addf %330, %331 : vector<8x32xf32>
    %333 = arith.negf %332 : vector<8x32xf32>
    %334 = math.exp %333 : vector<8x32xf32>
    %cst_75 = arith.constant 1.000000e+00 : f32
    %335 = vector.broadcast %cst_75 : f32 to vector<8x32xf32>
    %336 = arith.addf %335, %334 : vector<8x32xf32>
    %337 = arith.divf %335, %336 : vector<8x32xf32>
    %338 = vector.extract_strided_slice %328 {offsets = [0, 32], sizes = [8, 32], strides = [1, 1]} : vector<8x96xf32> to vector<8x32xf32>
    %339 = vector.extract_strided_slice %329 {offsets = [0, 32], sizes = [8, 32], strides = [1, 1]} : vector<8x96xf32> to vector<8x32xf32>
    %340 = arith.addf %338, %339 : vector<8x32xf32>
    %341 = arith.negf %340 : vector<8x32xf32>
    %342 = math.exp %341 : vector<8x32xf32>
    %cst_76 = arith.constant 1.000000e+00 : f32
    %343 = vector.broadcast %cst_76 : f32 to vector<8x32xf32>
    %344 = arith.addf %343, %342 : vector<8x32xf32>
    %345 = arith.divf %343, %344 : vector<8x32xf32>
    %346 = vector.extract_strided_slice %328 {offsets = [0, 64], sizes = [8, 32], strides = [1, 1]} : vector<8x96xf32> to vector<8x32xf32>
    %347 = vector.extract_strided_slice %329 {offsets = [0, 64], sizes = [8, 32], strides = [1, 1]} : vector<8x96xf32> to vector<8x32xf32>
    %348 = vector.broadcast %261 : vector<1x32xf32> to vector<8x32xf32>
    %349 = arith.addf %347, %348 : vector<8x32xf32>
    %350 = arith.mulf %337, %349 : vector<8x32xf32>
    %351 = arith.addf %346, %350 : vector<8x32xf32>
    %352 = math.tanh %351 : vector<8x32xf32>
    %cst_77 = arith.constant 1.000000e+00 : f32
    %353 = vector.broadcast %cst_77 : f32 to vector<8x32xf32>
    %354 = arith.subf %353, %345 : vector<8x32xf32>
    %355 = arith.mulf %354, %352 : vector<8x32xf32>
    %356 = arith.mulf %345, %327 : vector<8x32xf32>
    %357 = arith.addf %355, %356 : vector<8x32xf32>
    %358 = vector.extract_strided_slice %265 {offsets = [24, 0], sizes = [8, 96], strides = [1, 1]} : vector<64x96xf32> to vector<8x96xf32>
    %cst_78 = arith.constant dense<0.000000e+00> : vector<8x96xf32>
    %359 = tpu.matmul %357, %260, %cst_78 {dimension_numbers = #tpu.dot_dimension_numbers<[1], [0], [0], [1], [0, 0, 1, 1], [], []>} : vector<8x32xf32>, vector<32x96xf32>, vector<8x96xf32> -> vector<8x96xf32>
    %360 = vector.extract_strided_slice %358 {offsets = [0, 0], sizes = [8, 32], strides = [1, 1]} : vector<8x96xf32> to vector<8x32xf32>
    %361 = vector.extract_strided_slice %359 {offsets = [0, 0], sizes = [8, 32], strides = [1, 1]} : vector<8x96xf32> to vector<8x32xf32>
    %362 = arith.addf %360, %361 : vector<8x32xf32>
    %363 = arith.negf %362 : vector<8x32xf32>
    %364 = math.exp %363 : vector<8x32xf32>
    %cst_79 = arith.constant 1.000000e+00 : f32
    %365 = vector.broadcast %cst_79 : f32 to vector<8x32xf32>
    %366 = arith.addf %365, %364 : vector<8x32xf32>
    %367 = arith.divf %365, %366 : vector<8x32xf32>
    %368 = vector.extract_strided_slice %358 {offsets = [0, 32], sizes = [8, 32], strides = [1, 1]} : vector<8x96xf32> to vector<8x32xf32>
    %369 = vector.extract_strided_slice %359 {offsets = [0, 32], sizes = [8, 32], strides = [1, 1]} : vector<8x96xf32> to vector<8x32xf32>
    %370 = arith.addf %368, %369 : vector<8x32xf32>
    %371 = arith.negf %370 : vector<8x32xf32>
    %372 = math.exp %371 : vector<8x32xf32>
    %cst_80 = arith.constant 1.000000e+00 : f32
    %373 = vector.broadcast %cst_80 : f32 to vector<8x32xf32>
    %374 = arith.addf %373, %372 : vector<8x32xf32>
    %375 = arith.divf %373, %374 : vector<8x32xf32>
    %376 = vector.extract_strided_slice %358 {offsets = [0, 64], sizes = [8, 32], strides = [1, 1]} : vector<8x96xf32> to vector<8x32xf32>
    %377 = vector.extract_strided_slice %359 {offsets = [0, 64], sizes = [8, 32], strides = [1, 1]} : vector<8x96xf32> to vector<8x32xf32>
    %378 = vector.broadcast %261 : vector<1x32xf32> to vector<8x32xf32>
    %379 = arith.addf %377, %378 : vector<8x32xf32>
    %380 = arith.mulf %367, %379 : vector<8x32xf32>
    %381 = arith.addf %376, %380 : vector<8x32xf32>
    %382 = math.tanh %381 : vector<8x32xf32>
    %cst_81 = arith.constant 1.000000e+00 : f32
    %383 = vector.broadcast %cst_81 : f32 to vector<8x32xf32>
    %384 = arith.subf %383, %375 : vector<8x32xf32>
    %385 = arith.mulf %384, %382 : vector<8x32xf32>
    %386 = arith.mulf %375, %357 : vector<8x32xf32>
    %387 = arith.addf %385, %386 : vector<8x32xf32>
    %388 = vector.extract_strided_slice %265 {offsets = [32, 0], sizes = [8, 96], strides = [1, 1]} : vector<64x96xf32> to vector<8x96xf32>
    %cst_82 = arith.constant dense<0.000000e+00> : vector<8x96xf32>
    %389 = tpu.matmul %387, %260, %cst_82 {dimension_numbers = #tpu.dot_dimension_numbers<[1], [0], [0], [1], [0, 0, 1, 1], [], []>} : vector<8x32xf32>, vector<32x96xf32>, vector<8x96xf32> -> vector<8x96xf32>
    %390 = vector.extract_strided_slice %388 {offsets = [0, 0], sizes = [8, 32], strides = [1, 1]} : vector<8x96xf32> to vector<8x32xf32>
    %391 = vector.extract_strided_slice %389 {offsets = [0, 0], sizes = [8, 32], strides = [1, 1]} : vector<8x96xf32> to vector<8x32xf32>
    %392 = arith.addf %390, %391 : vector<8x32xf32>
    %393 = arith.negf %392 : vector<8x32xf32>
    %394 = math.exp %393 : vector<8x32xf32>
    %cst_83 = arith.constant 1.000000e+00 : f32
    %395 = vector.broadcast %cst_83 : f32 to vector<8x32xf32>
    %396 = arith.addf %395, %394 : vector<8x32xf32>
    %397 = arith.divf %395, %396 : vector<8x32xf32>
    %398 = vector.extract_strided_slice %388 {offsets = [0, 32], sizes = [8, 32], strides = [1, 1]} : vector<8x96xf32> to vector<8x32xf32>
    %399 = vector.extract_strided_slice %389 {offsets = [0, 32], sizes = [8, 32], strides = [1, 1]} : vector<8x96xf32> to vector<8x32xf32>
    %400 = arith.addf %398, %399 : vector<8x32xf32>
    %401 = arith.negf %400 : vector<8x32xf32>
    %402 = math.exp %401 : vector<8x32xf32>
    %cst_84 = arith.constant 1.000000e+00 : f32
    %403 = vector.broadcast %cst_84 : f32 to vector<8x32xf32>
    %404 = arith.addf %403, %402 : vector<8x32xf32>
    %405 = arith.divf %403, %404 : vector<8x32xf32>
    %406 = vector.extract_strided_slice %388 {offsets = [0, 64], sizes = [8, 32], strides = [1, 1]} : vector<8x96xf32> to vector<8x32xf32>
    %407 = vector.extract_strided_slice %389 {offsets = [0, 64], sizes = [8, 32], strides = [1, 1]} : vector<8x96xf32> to vector<8x32xf32>
    %408 = vector.broadcast %261 : vector<1x32xf32> to vector<8x32xf32>
    %409 = arith.addf %407, %408 : vector<8x32xf32>
    %410 = arith.mulf %397, %409 : vector<8x32xf32>
    %411 = arith.addf %406, %410 : vector<8x32xf32>
    %412 = math.tanh %411 : vector<8x32xf32>
    %cst_85 = arith.constant 1.000000e+00 : f32
    %413 = vector.broadcast %cst_85 : f32 to vector<8x32xf32>
    %414 = arith.subf %413, %405 : vector<8x32xf32>
    %415 = arith.mulf %414, %412 : vector<8x32xf32>
    %416 = arith.mulf %405, %387 : vector<8x32xf32>
    %417 = arith.addf %415, %416 : vector<8x32xf32>
    %418 = vector.extract_strided_slice %265 {offsets = [40, 0], sizes = [8, 96], strides = [1, 1]} : vector<64x96xf32> to vector<8x96xf32>
    %cst_86 = arith.constant dense<0.000000e+00> : vector<8x96xf32>
    %419 = tpu.matmul %417, %260, %cst_86 {dimension_numbers = #tpu.dot_dimension_numbers<[1], [0], [0], [1], [0, 0, 1, 1], [], []>} : vector<8x32xf32>, vector<32x96xf32>, vector<8x96xf32> -> vector<8x96xf32>
    %420 = vector.extract_strided_slice %418 {offsets = [0, 0], sizes = [8, 32], strides = [1, 1]} : vector<8x96xf32> to vector<8x32xf32>
    %421 = vector.extract_strided_slice %419 {offsets = [0, 0], sizes = [8, 32], strides = [1, 1]} : vector<8x96xf32> to vector<8x32xf32>
    %422 = arith.addf %420, %421 : vector<8x32xf32>
    %423 = arith.negf %422 : vector<8x32xf32>
    %424 = math.exp %423 : vector<8x32xf32>
    %cst_87 = arith.constant 1.000000e+00 : f32
    %425 = vector.broadcast %cst_87 : f32 to vector<8x32xf32>
    %426 = arith.addf %425, %424 : vector<8x32xf32>
    %427 = arith.divf %425, %426 : vector<8x32xf32>
    %428 = vector.extract_strided_slice %418 {offsets = [0, 32], sizes = [8, 32], strides = [1, 1]} : vector<8x96xf32> to vector<8x32xf32>
    %429 = vector.extract_strided_slice %419 {offsets = [0, 32], sizes = [8, 32], strides = [1, 1]} : vector<8x96xf32> to vector<8x32xf32>
    %430 = arith.addf %428, %429 : vector<8x32xf32>
    %431 = arith.negf %430 : vector<8x32xf32>
    %432 = math.exp %431 : vector<8x32xf32>
    %cst_88 = arith.constant 1.000000e+00 : f32
    %433 = vector.broadcast %cst_88 : f32 to vector<8x32xf32>
    %434 = arith.addf %433, %432 : vector<8x32xf32>
    %435 = arith.divf %433, %434 : vector<8x32xf32>
    %436 = vector.extract_strided_slice %418 {offsets = [0, 64], sizes = [8, 32], strides = [1, 1]} : vector<8x96xf32> to vector<8x32xf32>
    %437 = vector.extract_strided_slice %419 {offsets = [0, 64], sizes = [8, 32], strides = [1, 1]} : vector<8x96xf32> to vector<8x32xf32>
    %438 = vector.broadcast %261 : vector<1x32xf32> to vector<8x32xf32>
    %439 = arith.addf %437, %438 : vector<8x32xf32>
    %440 = arith.mulf %427, %439 : vector<8x32xf32>
    %441 = arith.addf %436, %440 : vector<8x32xf32>
    %442 = math.tanh %441 : vector<8x32xf32>
    %cst_89 = arith.constant 1.000000e+00 : f32
    %443 = vector.broadcast %cst_89 : f32 to vector<8x32xf32>
    %444 = arith.subf %443, %435 : vector<8x32xf32>
    %445 = arith.mulf %444, %442 : vector<8x32xf32>
    %446 = arith.mulf %435, %417 : vector<8x32xf32>
    %447 = arith.addf %445, %446 : vector<8x32xf32>
    %448 = vector.extract_strided_slice %265 {offsets = [48, 0], sizes = [8, 96], strides = [1, 1]} : vector<64x96xf32> to vector<8x96xf32>
    %cst_90 = arith.constant dense<0.000000e+00> : vector<8x96xf32>
    %449 = tpu.matmul %447, %260, %cst_90 {dimension_numbers = #tpu.dot_dimension_numbers<[1], [0], [0], [1], [0, 0, 1, 1], [], []>} : vector<8x32xf32>, vector<32x96xf32>, vector<8x96xf32> -> vector<8x96xf32>
    %450 = vector.extract_strided_slice %448 {offsets = [0, 0], sizes = [8, 32], strides = [1, 1]} : vector<8x96xf32> to vector<8x32xf32>
    %451 = vector.extract_strided_slice %449 {offsets = [0, 0], sizes = [8, 32], strides = [1, 1]} : vector<8x96xf32> to vector<8x32xf32>
    %452 = arith.addf %450, %451 : vector<8x32xf32>
    %453 = arith.negf %452 : vector<8x32xf32>
    %454 = math.exp %453 : vector<8x32xf32>
    %cst_91 = arith.constant 1.000000e+00 : f32
    %455 = vector.broadcast %cst_91 : f32 to vector<8x32xf32>
    %456 = arith.addf %455, %454 : vector<8x32xf32>
    %457 = arith.divf %455, %456 : vector<8x32xf32>
    %458 = vector.extract_strided_slice %448 {offsets = [0, 32], sizes = [8, 32], strides = [1, 1]} : vector<8x96xf32> to vector<8x32xf32>
    %459 = vector.extract_strided_slice %449 {offsets = [0, 32], sizes = [8, 32], strides = [1, 1]} : vector<8x96xf32> to vector<8x32xf32>
    %460 = arith.addf %458, %459 : vector<8x32xf32>
    %461 = arith.negf %460 : vector<8x32xf32>
    %462 = math.exp %461 : vector<8x32xf32>
    %cst_92 = arith.constant 1.000000e+00 : f32
    %463 = vector.broadcast %cst_92 : f32 to vector<8x32xf32>
    %464 = arith.addf %463, %462 : vector<8x32xf32>
    %465 = arith.divf %463, %464 : vector<8x32xf32>
    %466 = vector.extract_strided_slice %448 {offsets = [0, 64], sizes = [8, 32], strides = [1, 1]} : vector<8x96xf32> to vector<8x32xf32>
    %467 = vector.extract_strided_slice %449 {offsets = [0, 64], sizes = [8, 32], strides = [1, 1]} : vector<8x96xf32> to vector<8x32xf32>
    %468 = vector.broadcast %261 : vector<1x32xf32> to vector<8x32xf32>
    %469 = arith.addf %467, %468 : vector<8x32xf32>
    %470 = arith.mulf %457, %469 : vector<8x32xf32>
    %471 = arith.addf %466, %470 : vector<8x32xf32>
    %472 = math.tanh %471 : vector<8x32xf32>
    %cst_93 = arith.constant 1.000000e+00 : f32
    %473 = vector.broadcast %cst_93 : f32 to vector<8x32xf32>
    %474 = arith.subf %473, %465 : vector<8x32xf32>
    %475 = arith.mulf %474, %472 : vector<8x32xf32>
    %476 = arith.mulf %465, %447 : vector<8x32xf32>
    %477 = arith.addf %475, %476 : vector<8x32xf32>
    %478 = vector.extract_strided_slice %265 {offsets = [56, 0], sizes = [8, 96], strides = [1, 1]} : vector<64x96xf32> to vector<8x96xf32>
    %cst_94 = arith.constant dense<0.000000e+00> : vector<8x96xf32>
    %479 = tpu.matmul %477, %260, %cst_94 {dimension_numbers = #tpu.dot_dimension_numbers<[1], [0], [0], [1], [0, 0, 1, 1], [], []>} : vector<8x32xf32>, vector<32x96xf32>, vector<8x96xf32> -> vector<8x96xf32>
    %480 = vector.extract_strided_slice %478 {offsets = [0, 0], sizes = [8, 32], strides = [1, 1]} : vector<8x96xf32> to vector<8x32xf32>
    %481 = vector.extract_strided_slice %479 {offsets = [0, 0], sizes = [8, 32], strides = [1, 1]} : vector<8x96xf32> to vector<8x32xf32>
    %482 = arith.addf %480, %481 : vector<8x32xf32>
    %483 = arith.negf %482 : vector<8x32xf32>
    %484 = math.exp %483 : vector<8x32xf32>
    %cst_95 = arith.constant 1.000000e+00 : f32
    %485 = vector.broadcast %cst_95 : f32 to vector<8x32xf32>
    %486 = arith.addf %485, %484 : vector<8x32xf32>
    %487 = arith.divf %485, %486 : vector<8x32xf32>
    %488 = vector.extract_strided_slice %478 {offsets = [0, 32], sizes = [8, 32], strides = [1, 1]} : vector<8x96xf32> to vector<8x32xf32>
    %489 = vector.extract_strided_slice %479 {offsets = [0, 32], sizes = [8, 32], strides = [1, 1]} : vector<8x96xf32> to vector<8x32xf32>
    %490 = arith.addf %488, %489 : vector<8x32xf32>
    %491 = arith.negf %490 : vector<8x32xf32>
    %492 = math.exp %491 : vector<8x32xf32>
    %cst_96 = arith.constant 1.000000e+00 : f32
    %493 = vector.broadcast %cst_96 : f32 to vector<8x32xf32>
    %494 = arith.addf %493, %492 : vector<8x32xf32>
    %495 = arith.divf %493, %494 : vector<8x32xf32>
    %496 = vector.extract_strided_slice %478 {offsets = [0, 64], sizes = [8, 32], strides = [1, 1]} : vector<8x96xf32> to vector<8x32xf32>
    %497 = vector.extract_strided_slice %479 {offsets = [0, 64], sizes = [8, 32], strides = [1, 1]} : vector<8x96xf32> to vector<8x32xf32>
    %498 = vector.broadcast %261 : vector<1x32xf32> to vector<8x32xf32>
    %499 = arith.addf %497, %498 : vector<8x32xf32>
    %500 = arith.mulf %487, %499 : vector<8x32xf32>
    %501 = arith.addf %496, %500 : vector<8x32xf32>
    %502 = math.tanh %501 : vector<8x32xf32>
    %cst_97 = arith.constant 1.000000e+00 : f32
    %503 = vector.broadcast %cst_97 : f32 to vector<8x32xf32>
    %504 = arith.subf %503, %495 : vector<8x32xf32>
    %505 = arith.mulf %504, %502 : vector<8x32xf32>
    %506 = arith.mulf %495, %477 : vector<8x32xf32>
    %507 = arith.addf %505, %506 : vector<8x32xf32>
    %c0_98 = arith.constant 0 : index
    %c0_99 = arith.constant 0 : index
    %508 = vector.load %arg10[%c0_98, %c0_99] : memref<32x8xf32, #tpu.memory_space<vmem>>, vector<32x8xf32>
    %cst_100 = arith.constant dense<0.000000e+00> : vector<8x8xf32>
    %509 = tpu.matmul %507, %508, %cst_100 {dimension_numbers = #tpu.dot_dimension_numbers<[1], [0], [0], [1], [0, 0, 1, 1], [], []>} : vector<8x32xf32>, vector<32x8xf32>, vector<8x8xf32> -> vector<8x8xf32>
    %c0_101 = arith.constant 0 : index
    %c0_102 = arith.constant 0 : index
    %510 = vector.load %arg11[%c0_101, %c0_102] : memref<1x8xf32, #tpu.memory_space<vmem>>, vector<1x8xf32>
    %511 = vector.broadcast %510 : vector<1x8xf32> to vector<8x8xf32>
    %512 = arith.addf %509, %511 : vector<8x8xf32>
    %c0_103 = arith.constant 0 : index
    %c0_104 = arith.constant 0 : index
    %513 = vector.load %arg12[%c0_103, %c0_104] : memref<8x8xf32, #tpu.memory_space<vmem>>, vector<8x8xf32>
    tpu.vector_store %arg12[%c0_103, %c0_104], %512 {strides = array<i32>} : memref<8x8xf32, #tpu.memory_space<vmem>>, vector<8x8xf32>,
    return
  }
}

</mosaic_0001>

<llo_original>
// kernel: tpu_custom_call.1
$region0: #{tpu_custom_call.1}
  #allocation0 [shape = 'u32[]', space=smem, size = 0x4, offset = 0x4, fixed_abs, tag = 'smem constant byte address 0x4 - core index']
  #allocation1 [shape = 'u32[72,128]{1,0:T(1,128)}', space=vmem, size = 0x9000, scoped, tag = 'internal scratch']
  #allocation2 [shape = 'f32[64,32]{1,0:T(8,128)}', space=vmem, size = 0x8000, scoped, tag = 'scratch operand']
  %s0 = inlined_call_operand.vmem [shape: f32[64,16], index: 0, kind: input, shape index: {}]
  %s1 = inlined_call_operand.hbm [shape: f32[2,8,32], index: 1, kind: input, shape index: {}]
  %s2 = inlined_call_operand.hbm [shape: f32[16,96], index: 2, kind: input, shape index: {}]
  %s3 = inlined_call_operand.vmem [shape: f32[1,96], index: 3, kind: input, shape index: {}]
  %s4 = inlined_call_operand.vmem [shape: f32[32,96], index: 4, kind: input, shape index: {}]
  %s5 = inlined_call_operand.vmem [shape: f32[1,32], index: 5, kind: input, shape index: {}]
  %s6 = inlined_call_operand.vmem [shape: f32[32,96], index: 6, kind: input, shape index: {}]
  %s7 = inlined_call_operand.vmem [shape: f32[1,96], index: 7, kind: input, shape index: {}]
  %s8 = inlined_call_operand.vmem [shape: f32[32,96], index: 8, kind: input, shape index: {}]
  %s9 = inlined_call_operand.vmem [shape: f32[1,32], index: 9, kind: input, shape index: {}]
  %s10 = inlined_call_operand.vmem [shape: f32[32,8], index: 10, kind: input, shape index: {}]
  %s11 = inlined_call_operand.vmem [shape: f32[1,8], index: 11, kind: input, shape index: {}]
  %s12 = inlined_call_operand.hbm [shape: f32[8,8], index: 12, kind: output, shape index: {}]
  %s13 = sld [smem:[#allocation0]]
  $region66: #{tpu_custom_call.1} parent=0
    _
  %s15 = ssub.s32 1, %s13
  %s16 = scalar_select 0, %s15, %s13
  $region1: #{tpu_custom_call.1} parent=0
    #allocation3 [shape = 'u8[8192]{0}', space=vmem, size = 0x2000, scoped, tag = 'input window, operand 1, single buffered']
    #allocation4 [shape = 's32[1]{0}', space=sflag, size = 0x4, scoped, tag = 'scoped memory for tpu_custom_call.1']
    #allocation5 [shape = 's32[1]{0}', space=sflag, size = 0x4, scoped, tag = 'scoped memory for tpu_custom_call.1']
    #allocation6 [shape = 'u8[8192]{0}', space=vmem, size = 0x2000, scoped, tag = 'input window, operand 2, single buffered']
    #allocation7 [shape = 's32[1]{0}', space=sflag, size = 0x4, scoped, tag = 'scoped memory for tpu_custom_call.1']
    #allocation8 [shape = 'u8[4096]{0}', space=vmem, size = 0x1000, scoped, tag = 'output window, operand 0, single buffered']
    %17 = vsyncpa [#allocation4], 0
    %18 = vsyncpa [#allocation7], 0
    %19 = vsyncpa [#allocation5], 0
    // Predicated region
    $region2: #{tpu_custom_call.1} parent=1 // pred_check
      _
    $region3: #{tpu_custom_call.1} parent=1 // pred_check_branch
      %21 = sbr.rel (0) target = $region5
    $region4: #{tpu_custom_call.1} parent=1 // pred_region
      _
    $region5: #{tpu_custom_call.1} parent=1 // pred_fallthru
      _
    // Predicated region
    $region6: #{tpu_custom_call.1} parent=1 // pred_check
      _
    $region7: #{tpu_custom_call.1} parent=1 // pred_check_branch
      %23 = sbr.rel (0) target = $region9
    $region8: #{tpu_custom_call.1} parent=1 // pred_region
      %25 = vsyncadd [#allocation4], 0
      %s26 = sshll.u32 %s1, 4
      %s27 = int_to_ptr.hbm [resolvable:$true] %s26
      %s28 = sshll.u32 [#allocation3], 4
      %s29 = int_to_ptr.vmem [resolvable:$true] %s28
      %34 = dma.hbm_to_vmem [thread:$0]  %s27, 256, %s29, [#allocation4], 128, 128, 8
    $region9: #{tpu_custom_call.1} parent=1 // pred_fallthru
      _
    // Predicated region
    $region10: #{tpu_custom_call.1} parent=1 // pred_check
      _
    $region11: #{tpu_custom_call.1} parent=1 // pred_check_branch
      %36 = sbr.rel (0) target = $region13
    $region12: #{tpu_custom_call.1} parent=1 // pred_region
      %38 = vsyncadd [#allocation7], 0
      %s39 = sshll.u32 %s2, 4
      %s40 = int_to_ptr.hbm [resolvable:$true] %s39
      %s41 = sshll.u32 [#allocation6], 4
      %s42 = int_to_ptr.vmem [resolvable:$true] %s41
      %47 = dma.hbm_to_vmem [thread:$0]  %s40, 256, %s42, [#allocation7], 128, 128, 8
    $region13: #{tpu_custom_call.1} parent=1 // pred_fallthru
      _
    // Predicated region
    $region14: #{tpu_custom_call.1} parent=1 // pred_check
      _
    $region15: #{tpu_custom_call.1} parent=1 // pred_check_branch
      %49 = sbr.rel (0) target = $region17
    $region16: #{tpu_custom_call.1} parent=1 // pred_region
      _
    $region17: #{tpu_custom_call.1} parent=1 // pred_fallthru
      _
    // Predicated region
    $region18: #{tpu_custom_call.1} parent=1 // pred_check
      _
    $region19: #{tpu_custom_call.1} parent=1 // pred_check_branch
      %51 = sbr.rel (0) target = $region21
    $region20: #{tpu_custom_call.1} parent=1 // pred_region
      _
    $region21: #{tpu_custom_call.1} parent=1 // pred_fallthru
      _
    // Predicated region
    $region22: #{tpu_custom_call.1} parent=1 // pred_check
      _
    $region23: #{tpu_custom_call.1} parent=1 // pred_check_branch
      %53 = sbr.rel (0) target = $region25
    $region24: #{tpu_custom_call.1} parent=1 // pred_region
      _
    $region25: #{tpu_custom_call.1} parent=1 // pred_fallthru
      _
    // Predicated region
    $region26: #{tpu_custom_call.1} parent=1 // pred_check
      _
    $region27: #{tpu_custom_call.1} parent=1 // pred_check_branch
      %55 = sbr.rel (0) target = $region29
    $region28: #{tpu_custom_call.1} parent=1 // pred_region
      _
    $region29: #{tpu_custom_call.1} parent=1 // pred_fallthru
      _
    // Predicated region
    $region30: #{tpu_custom_call.1} parent=1 // pred_check
      _
    $region31: #{tpu_custom_call.1} parent=1 // pred_check_branch
      %57 = sbr.rel (0) target = $region33
    $region32: #{tpu_custom_call.1} parent=1 // pred_region
      _
    $region33: #{tpu_custom_call.1} parent=1 // pred_fallthru
      _
    // Predicated region
    $region34: #{tpu_custom_call.1} parent=1 // pred_check
      _
    $region35: #{tpu_custom_call.1} parent=1 // pred_check_branch
      %59 = sbr.rel (0) target = $region37
    $region36: #{tpu_custom_call.1} parent=1 // pred_region
      _
    $region37: #{tpu_custom_call.1} parent=1 // pred_fallthru
      _
    // Predicated region
    $region38: #{tpu_custom_call.1} parent=1 // pred_check
      _
    $region39: #{tpu_custom_call.1} parent=1 // pred_check_branch
      %61 = sbr.rel (0) target = $region41
    $region40: #{tpu_custom_call.1} parent=1 // pred_region
      _
    $region41: #{tpu_custom_call.1} parent=1 // pred_fallthru
      _
    // Predicated region
    $region42: #{tpu_custom_call.1} parent=1 // pred_check
      _
    $region43: #{tpu_custom_call.1} parent=1 // pred_check_branch
      %63 = sbr.rel (0) target = $region45
    $region44: #{tpu_custom_call.1} parent=1 // pred_region
      _
    $region45: #{tpu_custom_call.1} parent=1 // pred_fallthru
      _
    // Predicated region
    $region46: #{tpu_custom_call.1} parent=1 // pred_check
      _
    $region47: #{tpu_custom_call.1} parent=1 // pred_check_branch
      %65 = sbr.rel (0) target = $region49
    $region48: #{tpu_custom_call.1} parent=1 // pred_region
      _
    $region49: #{tpu_custom_call.1} parent=1 // pred_fallthru
      _
    // Predicated region
    $region50: #{tpu_custom_call.1} parent=1 // pred_check
      _
    $region51: #{tpu_custom_call.1} parent=1 // pred_check_branch
      %67 = sbr.rel (0) target = $region53
    $region52: #{tpu_custom_call.1} parent=1 // pred_region
      %69 = dma.done [#allocation4], 256
    $region53: #{tpu_custom_call.1} parent=1 // pred_fallthru
      _
    // Predicated region
    $region54: #{tpu_custom_call.1} parent=1 // pred_check
      _
    $region55: #{tpu_custom_call.1} parent=1 // pred_check_branch
      %71 = sbr.rel (0) target = $region57
    $region56: #{tpu_custom_call.1} parent=1 // pred_region
      %73 = dma.done [#allocation7], 256
    $region57: #{tpu_custom_call.1} parent=1 // pred_fallthru
      _
    %v74 = vld [vmem:[#allocation6] sm:$0xff]
    %v75 = vld [vmem:[#allocation6 + $0x8] sm:$0xff]
    %v76 = vld [vmem:[%s3] sm:$0x1]
    %v77 = vld [vmem:[%s4] sm:$0xff]
    %v78 = vld [vmem:[%s4 + $0x8] sm:$0xff]
    %v79 = vld [vmem:[%s4 + $0x10] sm:$0xff]
    %v80 = vld [vmem:[%s4 + $0x18] sm:$0xff]
    %v81 = vld [vmem:[%s5] sm:$0x1]
    %v82 = vld [vmem:[%s0] sm:$0xff]
    %v83 = vld [vmem:[%s0 + $0x8] sm:$0xff]
    %v84 = vld [vmem:[%s0 + $0x10] sm:$0xff]
    %v85 = vld [vmem:[%s0 + $0x18] sm:$0xff]
    %v86 = vld [vmem:[%s0 + $0x20] sm:$0xff]
    %v87 = vld [vmem:[%s0 + $0x28] sm:$0xff]
    %v88 = vld [vmem:[%s0 + $0x30] sm:$0xff]
    %v89 = vld [vmem:[%s0 + $0x38] sm:$0xff]
    %v91 = vperm.slane %v76, 0
    %vm93 = vcmask 130048
    %v95 = vsel %vm93, %v82, 0
    %v98 = vsel %vm93, %v83, 0
    %v101 = vsel %vm93, %v84, 0
    %v104 = vsel %vm93, %v85, 0
    %v107 = vsel %vm93, %v86, 0
    %v110 = vsel %vm93, %v87, 0
    %v113 = vsel %vm93, %v88, 0
    %v116 = vsel %vm93, %v89, 0
    %118 = vmatpush.msra.mxu0 0.0
    %119 = vmatpush.msra.mxu0 0.0
    %120 = vmatpush.msra.mxu0 0.0
    %121 = vmatpush.msra.mxu0 0.0
    %122 = vmatpush.msra.mxu0 0.0
    %123 = vmatpush.msra.mxu0 0.0
    %124 = vmatpush.msra.mxu0 0.0
    %125 = vmatpush.msra.mxu0 0.0
    %126 = vmatpush.msra.mxu0 0.0
    %127 = vmatpush.msra.mxu0 0.0
    %128 = vmatpush.msra.mxu0 0.0
    %129 = vmatpush.msra.mxu0 0.0
    %130 = vmatpush.msra.mxu0 0.0
    %131 = vmatpush.msra.mxu0 0.0
    %132 = vmatpush.msra.mxu0 %v75
    %133 = vmatpush.msra.mxu0 %v74
    %134 = vmatmul.f32.gmra.mxu0 %v95
    %v135 = vpop.f32.mrf.mxu0
    %v136 = vadd.f32 %v91, %v135
    %137 = vmatmul.f32.gmra.mxu0 %v98
    %v138 = vpop.f32.mrf.mxu0
    %v139 = vadd.f32 %v91, %v138
    %140 = vmatmul.f32.gmra.mxu0 %v101
    %v141 = vpop.f32.mrf.mxu0
    %v142 = vadd.f32 %v91, %v141
    %143 = vmatmul.f32.gmra.mxu0 %v104
    %v144 = vpop.f32.mrf.mxu0
    %v145 = vadd.f32 %v91, %v144
    %146 = vmatmul.f32.gmra.mxu0 %v107
    %v147 = vpop.f32.mrf.mxu0
    %v148 = vadd.f32 %v91, %v147
    %149 = vmatmul.f32.gmra.mxu0 %v110
    %v150 = vpop.f32.mrf.mxu0
    %v151 = vadd.f32 %v91, %v150
    %152 = vmatmul.f32.gmra.mxu0 %v113
    %v153 = vpop.f32.mrf.mxu0
    %v154 = vadd.f32 %v91, %v153
    %155 = vmatmul.f32.gmra.mxu0 %v116
    %v156 = vpop.f32.mrf.mxu0
    %v157 = vadd.f32 %v91, %v156
    %158 = vdwg.mxu0
    %v159 = vld [vmem:[#allocation3] sm:$0xff]
    %vm160 = vcmask 261120
    %v162 = vsel %vm160, %v159, 0
    %164 = vmatpush.msra.mxu0 0.0
    %165 = vmatpush.msra.mxu0 0.0
    %166 = vmatpush.msra.mxu0 0.0
    %167 = vmatpush.msra.mxu0 0.0
    %168 = vmatpush.msra.mxu0 0.0
    %169 = vmatpush.msra.mxu0 0.0
    %170 = vmatpush.msra.mxu0 0.0
    %171 = vmatpush.msra.mxu0 0.0
    %172 = vmatpush.msra.mxu0 0.0
    %173 = vmatpush.msra.mxu0 0.0
    %174 = vmatpush.msra.mxu0 0.0
    %175 = vmatpush.msra.mxu0 0.0
    %176 = vmatpush.msra.mxu0 %v80
    %177 = vmatpush.msra.mxu0 %v79
    %178 = vmatpush.msra.mxu0 %v78
    %179 = vmatpush.msra.mxu0 %v77
    %180 = vmatmul.f32.gmra.mxu0 %v162
    %v181 = vpop.f32.mrf.mxu0
    %v182 = vadd.f32 0.0, %v181
    %183 = vdwg.mxu0
    %v184 = vadd.f32 %v136, %v182
    %v185 = vxor.u32 %v184, 2147483648
    %v186 = vmul.f32 %v185, 1.442695
    %v187 = vpow.pop %v186
    %v188 = vadd.f32 %v187, 1.0
    %v189 = vrcp.pop %v188
    %v190 = vmul.f32 %v188, %v189
    %v191 = vsub.f32 1.0, %v190
    %v192 = vmul.f32 %v189, %v191
    %v193 = vadd.f32 %v189, %v192
    %vm194 = vweird.f32 %v188
    %vm195 = vweird.f32 %v189
    %vm196 = vmor %vm194, %vm195
    %v197 = vsel %vm196, %v189, %v193
    %v198 = vand.u32 2147483647, %v188
    %vm199 = vcmp.eq.f32.partialorder %v198, 8.507059e+37
    %v200 = vand.u32 %v188, 2147483648
    %v201 = vor.u32 1.1754944e-38, %v200
    %v202 = vsel %vm199, %v201, %v197
    %v203 = vmul.f32 1.0, %v202
    %v205 = vperm.slane %v81, 0
    %206 = vrot.lane.b32.xlu0 %v205, 64
    %v207 = vpop.permute.xlu0 %206
    %v209 = vadd.f32 %v182, %v207
    %211 = vrot.lane.b32.xlu0 %v209, 64
    %v212 = vpop.permute.xlu0 %211
    %v214 = vmul.f32 %v203, %v212
    %216 = vrot.lane.b32.xlu0 %v214, 64
    %v217 = vpop.permute.xlu0 %216
    %v219 = vadd.f32 %v136, %v217
    %v220 = vtanh.pop %v219
    %v221 = vsub.f32 1.0, %v203
    %223 = vrot.lane.b32.xlu0 %v220, 96
    %v224 = vpop.permute.xlu0 %223
    %v226 = vmul.f32 %v221, %v224
    %227 = vrot.lane.b32.xlu0 %v159, 32
    %v228 = vpop.permute.xlu0 %227
    %v230 = vmul.f32 %v203, %v228
    %v231 = vadd.f32 %v226, %v230
    %233 = vrot.lane.b32.xlu0 %v231, 96
    %v234 = vpop.permute.xlu0 %233
    %236 = vst.msk [vmem:[#allocation2] sm:$0xff] %vm160, %v234
    %v237 = vsel %vm160, %v234, 0
    %239 = vmatpush.msra.mxu0 0.0
    %240 = vmatpush.msra.mxu0 0.0
    %241 = vmatpush.msra.mxu0 0.0
    %242 = vmatpush.msra.mxu0 0.0
    %243 = vmatpush.msra.mxu0 0.0
    %244 = vmatpush.msra.mxu0 0.0
    %245 = vmatpush.msra.mxu0 0.0
    %246 = vmatpush.msra.mxu0 0.0
    %247 = vmatpush.msra.mxu0 0.0
    %248 = vmatpush.msra.mxu0 0.0
    %249 = vmatpush.msra.mxu0 0.0
    %250 = vmatpush.msra.mxu0 0.0
    %251 = vmatpush.msra.mxu0 %v80
    %252 = vmatpush.msra.mxu0 %v79
    %253 = vmatpush.msra.mxu0 %v78
    %254 = vmatpush.msra.mxu0 %v77
    %255 = vmatmul.f32.gmra.mxu0 %v237
    %v256 = vpop.f32.mrf.mxu0
    %v257 = vadd.f32 0.0, %v256
    %258 = vdwg.mxu0
    %v259 = vadd.f32 %v139, %v257
    %v260 = vxor.u32 %v259, 2147483648
    %v261 = vmul.f32 %v260, 1.442695
    %v262 = vpow.pop %v261
    %v263 = vadd.f32 %v262, 1.0
    %v264 = vrcp.pop %v263
    %v265 = vmul.f32 %v263, %v264
    %v266 = vsub.f32 1.0, %v265
    %v267 = vmul.f32 %v264, %v266
    %v268 = vadd.f32 %v264, %v267
    %vm269 = vweird.f32 %v263
    %vm270 = vweird.f32 %v264
    %vm271 = vmor %vm269, %vm270
    %v272 = vsel %vm271, %v264, %v268
    %v273 = vand.u32 2147483647, %v263
    %vm274 = vcmp.eq.f32.partialorder %v273, 8.507059e+37
    %v275 = vand.u32 %v263, 2147483648
    %v276 = vor.u32 1.1754944e-38, %v275
    %v277 = vsel %vm274, %v276, %v272
    %v278 = vmul.f32 1.0, %v277
    %v279 = vadd.f32 %v257, %v207
    %281 = vrot.lane.b32.xlu0 %v279, 64
    %v282 = vpop.permute.xlu0 %281
    %v284 = vmul.f32 %v278, %v282
    %286 = vrot.lane.b32.xlu0 %v284, 64
    %v287 = vpop.permute.xlu0 %286
    %v289 = vadd.f32 %v139, %v287
    %v290 = vtanh.pop %v289
    %v291 = vsub.f32 1.0, %v278
    %293 = vrot.lane.b32.xlu0 %v290, 96
    %v294 = vpop.permute.xlu0 %293
    %v296 = vmul.f32 %v291, %v294
    %v297 = vmul.f32 %v278, %v231
    %v298 = vadd.f32 %v296, %v297
    %300 = vrot.lane.b32.xlu0 %v298, 96
    %v301 = vpop.permute.xlu0 %300
    %303 = vst.msk [vmem:[#allocation2 + $0x8] sm:$0xff] %vm160, %v301
    %v304 = vsel %vm160, %v301, 0
    %306 = vmatpush.msra.mxu0 0.0
    %307 = vmatpush.msra.mxu0 0.0
    %308 = vmatpush.msra.mxu0 0.0
    %309 = vmatpush.msra.mxu0 0.0
    %310 = vmatpush.msra.mxu0 0.0
    %311 = vmatpush.msra.mxu0 0.0
    %312 = vmatpush.msra.mxu0 0.0
    %313 = vmatpush.msra.mxu0 0.0
    %314 = vmatpush.msra.mxu0 0.0
    %315 = vmatpush.msra.mxu0 0.0
    %316 = vmatpush.msra.mxu0 0.0
    %317 = vmatpush.msra.mxu0 0.0
    %318 = vmatpush.msra.mxu0 %v80
    %319 = vmatpush.msra.mxu0 %v79
    %320 = vmatpush.msra.mxu0 %v78
    %321 = vmatpush.msra.mxu0 %v77
    %322 = vmatmul.f32.gmra.mxu0 %v304
    %v323 = vpop.f32.mrf.mxu0
    %v324 = vadd.f32 0.0, %v323
    %325 = vdwg.mxu0
    %v326 = vadd.f32 %v142, %v324
    %v327 = vxor.u32 %v326, 2147483648
    %v328 = vmul.f32 %v327, 1.442695
    %v329 = vpow.pop %v328
    %v330 = vadd.f32 %v329, 1.0
    %v331 = vrcp.pop %v330
    %v332 = vmul.f32 %v330, %v331
    %v333 = vsub.f32 1.0, %v332
    %v334 = vmul.f32 %v331, %v333
    %v335 = vadd.f32 %v331, %v334
    %vm336 = vweird.f32 %v330
    %vm337 = vweird.f32 %v331
    %vm338 = vmor %vm336, %vm337
    %v339 = vsel %vm338, %v331, %v335
    %v340 = vand.u32 2147483647, %v330
    %vm341 = vcmp.eq.f32.partialorder %v340, 8.507059e+37
    %v342 = vand.u32 %v330, 2147483648
    %v343 = vor.u32 1.1754944e-38, %v342
    %v344 = vsel %vm341, %v343, %v339
    %v345 = vmul.f32 1.0, %v344
    %v346 = vadd.f32 %v324, %v207
    %348 = vrot.lane.b32.xlu0 %v346, 64
    %v349 = vpop.permute.xlu0 %348
    %v351 = vmul.f32 %v345, %v349
    %353 = vrot.lane.b32.xlu0 %v351, 64
    %v354 = vpop.permute.xlu0 %353
    %v356 = vadd.f32 %v142, %v354
    %v357 = vtanh.pop %v356
    %v358 = vsub.f32 1.0, %v345
    %360 = vrot.lane.b32.xlu0 %v357, 96
    %v361 = vpop.permute.xlu0 %360
    %v363 = vmul.f32 %v358, %v361
    %v364 = vmul.f32 %v345, %v298
    %v365 = vadd.f32 %v363, %v364
    %367 = vrot.lane.b32.xlu0 %v365, 96
    %v368 = vpop.permute.xlu0 %367
    %370 = vst.msk [vmem:[#allocation2 + $0x10] sm:$0xff] %vm160, %v368
    %v371 = vsel %vm160, %v368, 0
    %373 = vmatpush.msra.mxu0 0.0
    %374 = vmatpush.msra.mxu0 0.0
    %375 = vmatpush.msra.mxu0 0.0
    %376 = vmatpush.msra.mxu0 0.0
    %377 = vmatpush.msra.mxu0 0.0
    %378 = vmatpush.msra.mxu0 0.0
    %379 = vmatpush.msra.mxu0 0.0
    %380 = vmatpush.msra.mxu0 0.0
    %381 = vmatpush.msra.mxu0 0.0
    %382 = vmatpush.msra.mxu0 0.0
    %383 = vmatpush.msra.mxu0 0.0
    %384 = vmatpush.msra.mxu0 0.0
    %385 = vmatpush.msra.mxu0 %v80
    %386 = vmatpush.msra.mxu0 %v79
    %387 = vmatpush.msra.mxu0 %v78
    %388 = vmatpush.msra.mxu0 %v77
    %389 = vmatmul.f32.gmra.mxu0 %v371
    %v390 = vpop.f32.mrf.mxu0
    %v391 = vadd.f32 0.0, %v390
    %392 = vdwg.mxu0
    %v393 = vadd.f32 %v145, %v391
    %v394 = vxor.u32 %v393, 2147483648
    %v395 = vmul.f32 %v394, 1.442695
    %v396 = vpow.pop %v395
    %v397 = vadd.f32 %v396, 1.0
    %v398 = vrcp.pop %v397
    %v399 = vmul.f32 %v397, %v398
    %v400 = vsub.f32 1.0, %v399
    %v401 = vmul.f32 %v398, %v400
    %v402 = vadd.f32 %v398, %v401
    %vm403 = vweird.f32 %v397
    %vm404 = vweird.f32 %v398
    %vm405 = vmor %vm403, %vm404
    %v406 = vsel %vm405, %v398, %v402
    %v407 = vand.u32 2147483647, %v397
    %vm408 = vcmp.eq.f32.partialorder %v407, 8.507059e+37
    %v409 = vand.u32 %v397, 2147483648
    %v410 = vor.u32 1.1754944e-38, %v409
    %v411 = vsel %vm408, %v410, %v406
    %v412 = vmul.f32 1.0, %v411
    %v413 = vadd.f32 %v391, %v207
    %415 = vrot.lane.b32.xlu0 %v413, 64
    %v416 = vpop.permute.xlu0 %415
    %v418 = vmul.f32 %v412, %v416
    %420 = vrot.lane.b32.xlu0 %v418, 64
    %v421 = vpop.permute.xlu0 %420
    %v423 = vadd.f32 %v145, %v421
    %v424 = vtanh.pop %v423
    %v425 = vsub.f32 1.0, %v412
    %427 = vrot.lane.b32.xlu0 %v424, 96
    %v428 = vpop.permute.xlu0 %427
    %v430 = vmul.f32 %v425, %v428
    %v431 = vmul.f32 %v412, %v365
    %v432 = vadd.f32 %v430, %v431
    %434 = vrot.lane.b32.xlu0 %v432, 96
    %v435 = vpop.permute.xlu0 %434
    %437 = vst.msk [vmem:[#allocation2 + $0x18] sm:$0xff] %vm160, %v435
    %v438 = vsel %vm160, %v435, 0
    %440 = vmatpush.msra.mxu0 0.0
    %441 = vmatpush.msra.mxu0 0.0
    %442 = vmatpush.msra.mxu0 0.0
    %443 = vmatpush.msra.mxu0 0.0
    %444 = vmatpush.msra.mxu0 0.0
    %445 = vmatpush.msra.mxu0 0.0
    %446 = vmatpush.msra.mxu0 0.0
    %447 = vmatpush.msra.mxu0 0.0
    %448 = vmatpush.msra.mxu0 0.0
    %449 = vmatpush.msra.mxu0 0.0
    %450 = vmatpush.msra.mxu0 0.0
    %451 = vmatpush.msra.mxu0 0.0
    %452 = vmatpush.msra.mxu0 %v80
    %453 = vmatpush.msra.mxu0 %v79
    %454 = vmatpush.msra.mxu0 %v78
    %455 = vmatpush.msra.mxu0 %v77
    %456 = vmatmul.f32.gmra.mxu0 %v438
    %v457 = vpop.f32.mrf.mxu0
    %v458 = vadd.f32 0.0, %v457
    %459 = vdwg.mxu0
    %v460 = vadd.f32 %v148, %v458
    %v461 = vxor.u32 %v460, 2147483648
    %v462 = vmul.f32 %v461, 1.442695
    %v463 = vpow.pop %v462
    %v464 = vadd.f32 %v463, 1.0
    %v465 = vrcp.pop %v464
    %v466 = vmul.f32 %v464, %v465
    %v467 = vsub.f32 1.0, %v466
    %v468 = vmul.f32 %v465, %v467
    %v469 = vadd.f32 %v465, %v468
    %vm470 = vweird.f32 %v464
    %vm471 = vweird.f32 %v465
    %vm472 = vmor %vm470, %vm471
    %v473 = vsel %vm472, %v465, %v469
    %v474 = vand.u32 2147483647, %v464
    %vm475 = vcmp.eq.f32.partialorder %v474, 8.507059e+37
    %v476 = vand.u32 %v464, 2147483648
    %v477 = vor.u32 1.1754944e-38, %v476
    %v478 = vsel %vm475, %v477, %v473
    %v479 = vmul.f32 1.0, %v478
    %v480 = vadd.f32 %v458, %v207
    %482 = vrot.lane.b32.xlu0 %v480, 64
    %v483 = vpop.permute.xlu0 %482
    %v485 = vmul.f32 %v479, %v483
    %487 = vrot.lane.b32.xlu0 %v485, 64
    %v488 = vpop.permute.xlu0 %487
    %v490 = vadd.f32 %v148, %v488
    %v491 = vtanh.pop %v490
    %v492 = vsub.f32 1.0, %v479
    %494 = vrot.lane.b32.xlu0 %v491, 96
    %v495 = vpop.permute.xlu0 %494
    %v497 = vmul.f32 %v492, %v495
    %v498 = vmul.f32 %v479, %v432
    %v499 = vadd.f32 %v497, %v498
    %501 = vrot.lane.b32.xlu0 %v499, 96
    %v502 = vpop.permute.xlu0 %501
    %504 = vst.msk [vmem:[#allocation2 + $0x20] sm:$0xff] %vm160, %v502
    %v505 = vsel %vm160, %v502, 0
    %507 = vmatpush.msra.mxu0 0.0
    %508 = vmatpush.msra.mxu0 0.0
    %509 = vmatpush.msra.mxu0 0.0
    %510 = vmatpush.msra.mxu0 0.0
    %511 = vmatpush.msra.mxu0 0.0
    %512 = vmatpush.msra.mxu0 0.0
    %513 = vmatpush.msra.mxu0 0.0
    %514 = vmatpush.msra.mxu0 0.0
    %515 = vmatpush.msra.mxu0 0.0
    %516 = vmatpush.msra.mxu0 0.0
    %517 = vmatpush.msra.mxu0 0.0
    %518 = vmatpush.msra.mxu0 0.0
    %519 = vmatpush.msra.mxu0 %v80
    %520 = vmatpush.msra.mxu0 %v79
    %521 = vmatpush.msra.mxu0 %v78
    %522 = vmatpush.msra.mxu0 %v77
    %523 = vmatmul.f32.gmra.mxu0 %v505
    %v524 = vpop.f32.mrf.mxu0
    %v525 = vadd.f32 0.0, %v524
    %526 = vdwg.mxu0
    %v527 = vadd.f32 %v151, %v525
    %v528 = vxor.u32 %v527, 2147483648
    %v529 = vmul.f32 %v528, 1.442695
    %v530 = vpow.pop %v529
    %v531 = vadd.f32 %v530, 1.0
    %v532 = vrcp.pop %v531
    %v533 = vmul.f32 %v531, %v532
    %v534 = vsub.f32 1.0, %v533
    %v535 = vmul.f32 %v532, %v534
    %v536 = vadd.f32 %v532, %v535
    %vm537 = vweird.f32 %v531
    %vm538 = vweird.f32 %v532
    %vm539 = vmor %vm537, %vm538
    %v540 = vsel %vm539, %v532, %v536
    %v541 = vand.u32 2147483647, %v531
    %vm542 = vcmp.eq.f32.partialorder %v541, 8.507059e+37
    %v543 = vand.u32 %v531, 2147483648
    %v544 = vor.u32 1.1754944e-38, %v543
    %v545 = vsel %vm542, %v544, %v540
    %v546 = vmul.f32 1.0, %v545
    %v547 = vadd.f32 %v525, %v207
    %549 = vrot.lane.b32.xlu0 %v547, 64
    %v550 = vpop.permute.xlu0 %549
    %v552 = vmul.f32 %v546, %v550
    %554 = vrot.lane.b32.xlu0 %v552, 64
    %v555 = vpop.permute.xlu0 %554
    %v557 = vadd.f32 %v151, %v555
    %v558 = vtanh.pop %v557
    %v559 = vsub.f32 1.0, %v546
    %561 = vrot.lane.b32.xlu0 %v558, 96
    %v562 = vpop.permute.xlu0 %561
    %v564 = vmul.f32 %v559, %v562
    %v565 = vmul.f32 %v546, %v499
    %v566 = vadd.f32 %v564, %v565
    %568 = vrot.lane.b32.xlu0 %v566, 96
    %v569 = vpop.permute.xlu0 %568
    %571 = vst.msk [vmem:[#allocation2 + $0x28] sm:$0xff] %vm160, %v569
    %v572 = vsel %vm160, %v569, 0
    %574 = vmatpush.msra.mxu0 0.0
    %575 = vmatpush.msra.mxu0 0.0
    %576 = vmatpush.msra.mxu0 0.0
    %577 = vmatpush.msra.mxu0 0.0
    %578 = vmatpush.msra.mxu0 0.0
    %579 = vmatpush.msra.mxu0 0.0
    %580 = vmatpush.msra.mxu0 0.0
    %581 = vmatpush.msra.mxu0 0.0
    %582 = vmatpush.msra.mxu0 0.0
    %583 = vmatpush.msra.mxu0 0.0
    %584 = vmatpush.msra.mxu0 0.0
    %585 = vmatpush.msra.mxu0 0.0
    %586 = vmatpush.msra.mxu0 %v80
    %587 = vmatpush.msra.mxu0 %v79
    %588 = vmatpush.msra.mxu0 %v78
    %589 = vmatpush.msra.mxu0 %v77
    %590 = vmatmul.f32.gmra.mxu0 %v572
    %v591 = vpop.f32.mrf.mxu0
    %v592 = vadd.f32 0.0, %v591
    %593 = vdwg.mxu0
    %v594 = vadd.f32 %v154, %v592
    %v595 = vxor.u32 %v594, 2147483648
    %v596 = vmul.f32 %v595, 1.442695
    %v597 = vpow.pop %v596
    %v598 = vadd.f32 %v597, 1.0
    %v599 = vrcp.pop %v598
    %v600 = vmul.f32 %v598, %v599
    %v601 = vsub.f32 1.0, %v600
    %v602 = vmul.f32 %v599, %v601
    %v603 = vadd.f32 %v599, %v602
    %vm604 = vweird.f32 %v598
    %vm605 = vweird.f32 %v599
    %vm606 = vmor %vm604, %vm605
    %v607 = vsel %vm606, %v599, %v603
    %v608 = vand.u32 2147483647, %v598
    %vm609 = vcmp.eq.f32.partialorder %v608, 8.507059e+37
    %v610 = vand.u32 %v598, 2147483648
    %v611 = vor.u32 1.1754944e-38, %v610
    %v612 = vsel %vm609, %v611, %v607
    %v613 = vmul.f32 1.0, %v612
    %v614 = vadd.f32 %v592, %v207
    %616 = vrot.lane.b32.xlu0 %v614, 64
    %v617 = vpop.permute.xlu0 %616
    %v619 = vmul.f32 %v613, %v617
    %621 = vrot.lane.b32.xlu0 %v619, 64
    %v622 = vpop.permute.xlu0 %621
    %v624 = vadd.f32 %v154, %v622
    %v625 = vtanh.pop %v624
    %v626 = vsub.f32 1.0, %v613
    %628 = vrot.lane.b32.xlu0 %v625, 96
    %v629 = vpop.permute.xlu0 %628
    %v631 = vmul.f32 %v626, %v629
    %v632 = vmul.f32 %v613, %v566
    %v633 = vadd.f32 %v631, %v632
    %635 = vrot.lane.b32.xlu0 %v633, 96
    %v636 = vpop.permute.xlu0 %635
    %638 = vst.msk [vmem:[#allocation2 + $0x30] sm:$0xff] %vm160, %v636
    %v639 = vsel %vm160, %v636, 0
    %641 = vmatpush.msra.mxu0 0.0
    %642 = vmatpush.msra.mxu0 0.0
    %643 = vmatpush.msra.mxu0 0.0
    %644 = vmatpush.msra.mxu0 0.0
    %645 = vmatpush.msra.mxu0 0.0
    %646 = vmatpush.msra.mxu0 0.0
    %647 = vmatpush.msra.mxu0 0.0
    %648 = vmatpush.msra.mxu0 0.0
    %649 = vmatpush.msra.mxu0 0.0
    %650 = vmatpush.msra.mxu0 0.0
    %651 = vmatpush.msra.mxu0 0.0
    %652 = vmatpush.msra.mxu0 0.0
    %653 = vmatpush.msra.mxu0 %v80
    %654 = vmatpush.msra.mxu0 %v79
    %655 = vmatpush.msra.mxu0 %v78
    %656 = vmatpush.msra.mxu0 %v77
    %657 = vmatmul.f32.gmra.mxu0 %v639
    %v658 = vpop.f32.mrf.mxu0
    %v659 = vadd.f32 0.0, %v658
    %660 = vdwg.mxu0
    %v661 = vadd.f32 %v157, %v659
    %v662 = vxor.u32 %v661, 2147483648
    %v663 = vmul.f32 %v662, 1.442695
    %v664 = vpow.pop %v663
    %v665 = vadd.f32 %v664, 1.0
    %v666 = vrcp.pop %v665
    %v667 = vmul.f32 %v665, %v666
    %v668 = vsub.f32 1.0, %v667
    %v669 = vmul.f32 %v666, %v668
    %v670 = vadd.f32 %v666, %v669
    %vm671 = vweird.f32 %v665
    %vm672 = vweird.f32 %v666
    %vm673 = vmor %vm671, %vm672
    %v674 = vsel %vm673, %v666, %v670
    %v675 = vand.u32 2147483647, %v665
    %vm676 = vcmp.eq.f32.partialorder %v675, 8.507059e+37
    %v677 = vand.u32 %v665, 2147483648
    %v678 = vor.u32 1.1754944e-38, %v677
    %v679 = vsel %vm676, %v678, %v674
    %v680 = vmul.f32 1.0, %v679
    %v681 = vadd.f32 %v659, %v207
    %683 = vrot.lane.b32.xlu0 %v681, 64
    %v684 = vpop.permute.xlu0 %683
    %v686 = vmul.f32 %v680, %v684
    %688 = vrot.lane.b32.xlu0 %v686, 64
    %v689 = vpop.permute.xlu0 %688
    %v691 = vadd.f32 %v157, %v689
    %v692 = vtanh.pop %v691
    %v693 = vsub.f32 1.0, %v680
    %695 = vrot.lane.b32.xlu0 %v692, 96
    %v696 = vpop.permute.xlu0 %695
    %v698 = vmul.f32 %v693, %v696
    %v699 = vmul.f32 %v680, %v633
    %v700 = vadd.f32 %v698, %v699
    %702 = vrot.lane.b32.xlu0 %v700, 96
    %v703 = vpop.permute.xlu0 %702
    %705 = vst.msk [vmem:[#allocation2 + $0x38] sm:$0xff] %vm160, %v703
    %v706 = vld [vmem:[%s6] sm:$0xff]
    %v707 = vld [vmem:[%s6 + $0x8] sm:$0xff]
    %v708 = vld [vmem:[%s6 + $0x10] sm:$0xff]
    %v709 = vld [vmem:[%s6 + $0x18] sm:$0xff]
    %v710 = vld [vmem:[%s7] sm:$0x1]
    %v711 = vld [vmem:[%s8] sm:$0xff]
    %v712 = vld [vmem:[%s8 + $0x8] sm:$0xff]
    %v713 = vld [vmem:[%s8 + $0x10] sm:$0xff]
    %v714 = vld [vmem:[%s8 + $0x18] sm:$0xff]
    %v715 = vld [vmem:[%s9] sm:$0x1]
    %v716 = vld [vmem:[#allocation2] sm:$0xff]
    %v717 = vld [vmem:[#allocation2 + $0x8] sm:$0xff]
    %v718 = vld [vmem:[#allocation2 + $0x10] sm:$0xff]
    %v719 = vld [vmem:[#allocation2 + $0x18] sm:$0xff]
    %v720 = vld [vmem:[#allocation2 + $0x20] sm:$0xff]
    %v721 = vld [vmem:[#allocation2 + $0x28] sm:$0xff]
    %v722 = vld [vmem:[#allocation2 + $0x30] sm:$0xff]
    %v723 = vld [vmem:[#allocation2 + $0x38] sm:$0xff]
    %v725 = vperm.slane %v710, 0
    %v728 = vsel %vm160, %v716, 0
    %v731 = vsel %vm160, %v717, 0
    %v734 = vsel %vm160, %v718, 0
    %v737 = vsel %vm160, %v719, 0
    %v740 = vsel %vm160, %v720, 0
    %v743 = vsel %vm160, %v721, 0
    %v746 = vsel %vm160, %v722, 0
    %v749 = vsel %vm160, %v723, 0
    %751 = vmatpush.msra.mxu0 0.0
    %752 = vmatpush.msra.mxu0 0.0
    %753 = vmatpush.msra.mxu0 0.0
    %754 = vmatpush.msra.mxu0 0.0
    %755 = vmatpush.msra.mxu0 0.0
    %756 = vmatpush.msra.mxu0 0.0
    %757 = vmatpush.msra.mxu0 0.0
    %758 = vmatpush.msra.mxu0 0.0
    %759 = vmatpush.msra.mxu0 0.0
    %760 = vmatpush.msra.mxu0 0.0
    %761 = vmatpush.msra.mxu0 0.0
    %762 = vmatpush.msra.mxu0 0.0
    %763 = vmatpush.msra.mxu0 %v709
    %764 = vmatpush.msra.mxu0 %v708
    %765 = vmatpush.msra.mxu0 %v707
    %766 = vmatpush.msra.mxu0 %v706
    %767 = vmatmul.f32.gmra.mxu0 %v728
    %v768 = vpop.f32.mrf.mxu0
    %v769 = vadd.f32 %v725, %v768
    %770 = vmatmul.f32.gmra.mxu0 %v731
    %v771 = vpop.f32.mrf.mxu0
    %v772 = vadd.f32 %v725, %v771
    %773 = vmatmul.f32.gmra.mxu0 %v734
    %v774 = vpop.f32.mrf.mxu0
    %v775 = vadd.f32 %v725, %v774
    %776 = vmatmul.f32.gmra.mxu0 %v737
    %v777 = vpop.f32.mrf.mxu0
    %v778 = vadd.f32 %v725, %v777
    %779 = vmatmul.f32.gmra.mxu0 %v740
    %v780 = vpop.f32.mrf.mxu0
    %v781 = vadd.f32 %v725, %v780
    %782 = vmatmul.f32.gmra.mxu0 %v743
    %v783 = vpop.f32.mrf.mxu0
    %v784 = vadd.f32 %v725, %v783
    %785 = vmatmul.f32.gmra.mxu0 %v746
    %v786 = vpop.f32.mrf.mxu0
    %v787 = vadd.f32 %v725, %v786
    %788 = vmatmul.f32.gmra.mxu0 %v749
    %v789 = vpop.f32.mrf.mxu0
    %v790 = vadd.f32 %v725, %v789
    %791 = vdwg.mxu0
    %s792 = scalar_lea.vmem [#allocation3], 8
    %v793 = vld [vmem:[%s792] sm:$0xff]
    %v795 = vsel %vm160, %v793, 0
    %797 = vmatpush.msra.mxu0 0.0
    %798 = vmatpush.msra.mxu0 0.0
    %799 = vmatpush.msra.mxu0 0.0
    %800 = vmatpush.msra.mxu0 0.0
    %801 = vmatpush.msra.mxu0 0.0
    %802 = vmatpush.msra.mxu0 0.0
    %803 = vmatpush.msra.mxu0 0.0
    %804 = vmatpush.msra.mxu0 0.0
    %805 = vmatpush.msra.mxu0 0.0
    %806 = vmatpush.msra.mxu0 0.0
    %807 = vmatpush.msra.mxu0 0.0
    %808 = vmatpush.msra.mxu0 0.0
    %809 = vmatpush.msra.mxu0 %v714
    %810 = vmatpush.msra.mxu0 %v713
    %811 = vmatpush.msra.mxu0 %v712
    %812 = vmatpush.msra.mxu0 %v711
    %813 = vmatmul.f32.gmra.mxu0 %v795
    %v814 = vpop.f32.mrf.mxu0
    %v815 = vadd.f32 0.0, %v814
    %816 = vdwg.mxu0
    %v817 = vadd.f32 %v769, %v815
    %v818 = vxor.u32 %v817, 2147483648
    %v819 = vmul.f32 %v818, 1.442695
    %v820 = vpow.pop %v819
    %v821 = vadd.f32 %v820, 1.0
    %v822 = vrcp.pop %v821
    %v823 = vmul.f32 %v821, %v822
    %v824 = vsub.f32 1.0, %v823
    %v825 = vmul.f32 %v822, %v824
    %v826 = vadd.f32 %v822, %v825
    %vm827 = vweird.f32 %v821
    %vm828 = vweird.f32 %v822
    %vm829 = vmor %vm827, %vm828
    %v830 = vsel %vm829, %v822, %v826
    %v831 = vand.u32 2147483647, %v821
    %vm832 = vcmp.eq.f32.partialorder %v831, 8.507059e+37
    %v833 = vand.u32 %v821, 2147483648
    %v834 = vor.u32 1.1754944e-38, %v833
    %v835 = vsel %vm832, %v834, %v830
    %v836 = vmul.f32 1.0, %v835
    %v838 = vperm.slane %v715, 0
    %839 = vrot.lane.b32.xlu0 %v838, 64
    %v840 = vpop.permute.xlu0 %839
    %v842 = vadd.f32 %v815, %v840
    %844 = vrot.lane.b32.xlu0 %v842, 64
    %v845 = vpop.permute.xlu0 %844
    %v847 = vmul.f32 %v836, %v845
    %849 = vrot.lane.b32.xlu0 %v847, 64
    %v850 = vpop.permute.xlu0 %849
    %v852 = vadd.f32 %v769, %v850
    %v853 = vtanh.pop %v852
    %v854 = vsub.f32 1.0, %v836
    %856 = vrot.lane.b32.xlu0 %v853, 96
    %v857 = vpop.permute.xlu0 %856
    %v859 = vmul.f32 %v854, %v857
    %860 = vrot.lane.b32.xlu0 %v793, 32
    %v861 = vpop.permute.xlu0 %860
    %v863 = vmul.f32 %v836, %v861
    %v864 = vadd.f32 %v859, %v863
    %866 = vrot.lane.b32.xlu0 %v864, 96
    %v867 = vpop.permute.xlu0 %866
    %v868 = vsel %vm160, %v867, 0
    %870 = vmatpush.msra.mxu0 0.0
    %871 = vmatpush.msra.mxu0 0.0
    %872 = vmatpush.msra.mxu0 0.0
    %873 = vmatpush.msra.mxu0 0.0
    %874 = vmatpush.msra.mxu0 0.0
    %875 = vmatpush.msra.mxu0 0.0
    %876 = vmatpush.msra.mxu0 0.0
    %877 = vmatpush.msra.mxu0 0.0
    %878 = vmatpush.msra.mxu0 0.0
    %879 = vmatpush.msra.mxu0 0.0
    %880 = vmatpush.msra.mxu0 0.0
    %881 = vmatpush.msra.mxu0 0.0
    %882 = vmatpush.msra.mxu0 %v714
    %883 = vmatpush.msra.mxu0 %v713
    %884 = vmatpush.msra.mxu0 %v712
    %885 = vmatpush.msra.mxu0 %v711
    %886 = vmatmul.f32.gmra.mxu0 %v868
    %v887 = vpop.f32.mrf.mxu0
    %v888 = vadd.f32 0.0, %v887
    %889 = vdwg.mxu0
    %v890 = vadd.f32 %v772, %v888
    %v891 = vxor.u32 %v890, 2147483648
    %v892 = vmul.f32 %v891, 1.442695
    %v893 = vpow.pop %v892
    %v894 = vadd.f32 %v893, 1.0
    %v895 = vrcp.pop %v894
    %v896 = vmul.f32 %v894, %v895
    %v897 = vsub.f32 1.0, %v896
    %v898 = vmul.f32 %v895, %v897
    %v899 = vadd.f32 %v895, %v898
    %vm900 = vweird.f32 %v894
    %vm901 = vweird.f32 %v895
    %vm902 = vmor %vm900, %vm901
    %v903 = vsel %vm902, %v895, %v899
    %v904 = vand.u32 2147483647, %v894
    %vm905 = vcmp.eq.f32.partialorder %v904, 8.507059e+37
    %v906 = vand.u32 %v894, 2147483648
    %v907 = vor.u32 1.1754944e-38, %v906
    %v908 = vsel %vm905, %v907, %v903
    %v909 = vmul.f32 1.0, %v908
    %v910 = vadd.f32 %v888, %v840
    %912 = vrot.lane.b32.xlu0 %v910, 64
    %v913 = vpop.permute.xlu0 %912
    %v915 = vmul.f32 %v909, %v913
    %917 = vrot.lane.b32.xlu0 %v915, 64
    %v918 = vpop.permute.xlu0 %917
    %v920 = vadd.f32 %v772, %v918
    %v921 = vtanh.pop %v920
    %v922 = vsub.f32 1.0, %v909
    %924 = vrot.lane.b32.xlu0 %v921, 96
    %v925 = vpop.permute.xlu0 %924
    %v927 = vmul.f32 %v922, %v925
    %v928 = vmul.f32 %v909, %v864
    %v929 = vadd.f32 %v927, %v928
    %931 = vrot.lane.b32.xlu0 %v929, 96
    %v932 = vpop.permute.xlu0 %931
    %v933 = vsel %vm160, %v932, 0
    %935 = vmatpush.msra.mxu0 0.0
    %936 = vmatpush.msra.mxu0 0.0
    %937 = vmatpush.msra.mxu0 0.0
    %938 = vmatpush.msra.mxu0 0.0
    %939 = vmatpush.msra.mxu0 0.0
    %940 = vmatpush.msra.mxu0 0.0
    %941 = vmatpush.msra.mxu0 0.0
    %942 = vmatpush.msra.mxu0 0.0
    %943 = vmatpush.msra.mxu0 0.0
    %944 = vmatpush.msra.mxu0 0.0
    %945 = vmatpush.msra.mxu0 0.0
    %946 = vmatpush.msra.mxu0 0.0
    %947 = vmatpush.msra.mxu0 %v714
    %948 = vmatpush.msra.mxu0 %v713
    %949 = vmatpush.msra.mxu0 %v712
    %950 = vmatpush.msra.mxu0 %v711
    %951 = vmatmul.f32.gmra.mxu0 %v933
    %v952 = vpop.f32.mrf.mxu0
    %v953 = vadd.f32 0.0, %v952
    %954 = vdwg.mxu0
    %v955 = vadd.f32 %v775, %v953
    %v956 = vxor.u32 %v955, 2147483648
    %v957 = vmul.f32 %v956, 1.442695
    %v958 = vpow.pop %v957
    %v959 = vadd.f32 %v958, 1.0
    %v960 = vrcp.pop %v959
    %v961 = vmul.f32 %v959, %v960
    %v962 = vsub.f32 1.0, %v961
    %v963 = vmul.f32 %v960, %v962
    %v964 = vadd.f32 %v960, %v963
    %vm965 = vweird.f32 %v959
    %vm966 = vweird.f32 %v960
    %vm967 = vmor %vm965, %vm966
    %v968 = vsel %vm967, %v960, %v964
    %v969 = vand.u32 2147483647, %v959
    %vm970 = vcmp.eq.f32.partialorder %v969, 8.507059e+37
    %v971 = vand.u32 %v959, 2147483648
    %v972 = vor.u32 1.1754944e-38, %v971
    %v973 = vsel %vm970, %v972, %v968
    %v974 = vmul.f32 1.0, %v973
    %v975 = vadd.f32 %v953, %v840
    %977 = vrot.lane.b32.xlu0 %v975, 64
    %v978 = vpop.permute.xlu0 %977
    %v980 = vmul.f32 %v974, %v978
    %982 = vrot.lane.b32.xlu0 %v980, 64
    %v983 = vpop.permute.xlu0 %982
    %v985 = vadd.f32 %v775, %v983
    %v986 = vtanh.pop %v985
    %v987 = vsub.f32 1.0, %v974
    %989 = vrot.lane.b32.xlu0 %v986, 96
    %v990 = vpop.permute.xlu0 %989
    %v992 = vmul.f32 %v987, %v990
    %v993 = vmul.f32 %v974, %v929
    %v994 = vadd.f32 %v992, %v993
    %996 = vrot.lane.b32.xlu0 %v994, 96
    %v997 = vpop.permute.xlu0 %996
    %v998 = vsel %vm160, %v997, 0
    %1000 = vmatpush.msra.mxu0 0.0
    %1001 = vmatpush.msra.mxu0 0.0
    %1002 = vmatpush.msra.mxu0 0.0
    %1003 = vmatpush.msra.mxu0 0.0
    %1004 = vmatpush.msra.mxu0 0.0
    %1005 = vmatpush.msra.mxu0 0.0
    %1006 = vmatpush.msra.mxu0 0.0
    %1007 = vmatpush.msra.mxu0 0.0
    %1008 = vmatpush.msra.mxu0 0.0
    %1009 = vmatpush.msra.mxu0 0.0
    %1010 = vmatpush.msra.mxu0 0.0
    %1011 = vmatpush.msra.mxu0 0.0
    %1012 = vmatpush.msra.mxu0 %v714
    %1013 = vmatpush.msra.mxu0 %v713
    %1014 = vmatpush.msra.mxu0 %v712
    %1015 = vmatpush.msra.mxu0 %v711
    %1016 = vmatmul.f32.gmra.mxu0 %v998
    %v1017 = vpop.f32.mrf.mxu0
    %v1018 = vadd.f32 0.0, %v1017
    %1019 = vdwg.mxu0
    %v1020 = vadd.f32 %v778, %v1018
    %v1021 = vxor.u32 %v1020, 2147483648
    %v1022 = vmul.f32 %v1021, 1.442695
    %v1023 = vpow.pop %v1022
    %v1024 = vadd.f32 %v1023, 1.0
    %v1025 = vrcp.pop %v1024
    %v1026 = vmul.f32 %v1024, %v1025
    %v1027 = vsub.f32 1.0, %v1026
    %v1028 = vmul.f32 %v1025, %v1027
    %v1029 = vadd.f32 %v1025, %v1028
    %vm1030 = vweird.f32 %v1024
    %vm1031 = vweird.f32 %v1025
    %vm1032 = vmor %vm1030, %vm1031
    %v1033 = vsel %vm1032, %v1025, %v1029
    %v1034 = vand.u32 2147483647, %v1024
    %vm1035 = vcmp.eq.f32.partialorder %v1034, 8.507059e+37
    %v1036 = vand.u32 %v1024, 2147483648
    %v1037 = vor.u32 1.1754944e-38, %v1036
    %v1038 = vsel %vm1035, %v1037, %v1033
    %v1039 = vmul.f32 1.0, %v1038
    %v1040 = vadd.f32 %v1018, %v840
    %1042 = vrot.lane.b32.xlu0 %v1040, 64
    %v1043 = vpop.permute.xlu0 %1042
    %v1045 = vmul.f32 %v1039, %v1043
    %1047 = vrot.lane.b32.xlu0 %v1045, 64
    %v1048 = vpop.permute.xlu0 %1047
    %v1050 = vadd.f32 %v778, %v1048
    %v1051 = vtanh.pop %v1050
    %v1052 = vsub.f32 1.0, %v1039
    %1054 = vrot.lane.b32.xlu0 %v1051, 96
    %v1055 = vpop.permute.xlu0 %1054
    %v1057 = vmul.f32 %v1052, %v1055
    %v1058 = vmul.f32 %v1039, %v994
    %v1059 = vadd.f32 %v1057, %v1058
    %1061 = vrot.lane.b32.xlu0 %v1059, 96
    %v1062 = vpop.permute.xlu0 %1061
    %v1063 = vsel %vm160, %v1062, 0
    %1065 = vmatpush.msra.mxu0 0.0
    %1066 = vmatpush.msra.mxu0 0.0
    %1067 = vmatpush.msra.mxu0 0.0
    %1068 = vmatpush.msra.mxu0 0.0
    %1069 = vmatpush.msra.mxu0 0.0
    %1070 = vmatpush.msra.mxu0 0.0
    %1071 = vmatpush.msra.mxu0 0.0
    %1072 = vmatpush.msra.mxu0 0.0
    %1073 = vmatpush.msra.mxu0 0.0
    %1074 = vmatpush.msra.mxu0 0.0
    %1075 = vmatpush.msra.mxu0 0.0
    %1076 = vmatpush.msra.mxu0 0.0
    %1077 = vmatpush.msra.mxu0 %v714
    %1078 = vmatpush.msra.mxu0 %v713
    %1079 = vmatpush.msra.mxu0 %v712
    %1080 = vmatpush.msra.mxu0 %v711
    %1081 = vmatmul.f32.gmra.mxu0 %v1063
    %v1082 = vpop.f32.mrf.mxu0
    %v1083 = vadd.f32 0.0, %v1082
    %1084 = vdwg.mxu0
    %v1085 = vadd.f32 %v781, %v1083
    %v1086 = vxor.u32 %v1085, 2147483648
    %v1087 = vmul.f32 %v1086, 1.442695
    %v1088 = vpow.pop %v1087
    %v1089 = vadd.f32 %v1088, 1.0
    %v1090 = vrcp.pop %v1089
    %v1091 = vmul.f32 %v1089, %v1090
    %v1092 = vsub.f32 1.0, %v1091
    %v1093 = vmul.f32 %v1090, %v1092
    %v1094 = vadd.f32 %v1090, %v1093
    %vm1095 = vweird.f32 %v1089
    %vm1096 = vweird.f32 %v1090
    %vm1097 = vmor %vm1095, %vm1096
    %v1098 = vsel %vm1097, %v1090, %v1094
    %v1099 = vand.u32 2147483647, %v1089
    %vm1100 = vcmp.eq.f32.partialorder %v1099, 8.507059e+37
    %v1101 = vand.u32 %v1089, 2147483648
    %v1102 = vor.u32 1.1754944e-38, %v1101
    %v1103 = vsel %vm1100, %v1102, %v1098
    %v1104 = vmul.f32 1.0, %v1103
    %v1105 = vadd.f32 %v1083, %v840
    %1107 = vrot.lane.b32.xlu0 %v1105, 64
    %v1108 = vpop.permute.xlu0 %1107
    %v1110 = vmul.f32 %v1104, %v1108
    %1112 = vrot.lane.b32.xlu0 %v1110, 64
    %v1113 = vpop.permute.xlu0 %1112
    %v1115 = vadd.f32 %v781, %v1113
    %v1116 = vtanh.pop %v1115
    %v1117 = vsub.f32 1.0, %v1104
    %1119 = vrot.lane.b32.xlu0 %v1116, 96
    %v1120 = vpop.permute.xlu0 %1119
    %v1122 = vmul.f32 %v1117, %v1120
    %v1123 = vmul.f32 %v1104, %v1059
    %v1124 = vadd.f32 %v1122, %v1123
    %1126 = vrot.lane.b32.xlu0 %v1124, 96
    %v1127 = vpop.permute.xlu0 %1126
    %v1128 = vsel %vm160, %v1127, 0
    %1130 = vmatpush.msra.mxu0 0.0
    %1131 = vmatpush.msra.mxu0 0.0
    %1132 = vmatpush.msra.mxu0 0.0
    %1133 = vmatpush.msra.mxu0 0.0
    %1134 = vmatpush.msra.mxu0 0.0
    %1135 = vmatpush.msra.mxu0 0.0
    %1136 = vmatpush.msra.mxu0 0.0
    %1137 = vmatpush.msra.mxu0 0.0
    %1138 = vmatpush.msra.mxu0 0.0
    %1139 = vmatpush.msra.mxu0 0.0
    %1140 = vmatpush.msra.mxu0 0.0
    %1141 = vmatpush.msra.mxu0 0.0
    %1142 = vmatpush.msra.mxu0 %v714
    %1143 = vmatpush.msra.mxu0 %v713
    %1144 = vmatpush.msra.mxu0 %v712
    %1145 = vmatpush.msra.mxu0 %v711
    %1146 = vmatmul.f32.gmra.mxu0 %v1128
    %v1147 = vpop.f32.mrf.mxu0
    %v1148 = vadd.f32 0.0, %v1147
    %1149 = vdwg.mxu0
    %v1150 = vadd.f32 %v784, %v1148
    %v1151 = vxor.u32 %v1150, 2147483648
    %v1152 = vmul.f32 %v1151, 1.442695
    %v1153 = vpow.pop %v1152
    %v1154 = vadd.f32 %v1153, 1.0
    %v1155 = vrcp.pop %v1154
    %v1156 = vmul.f32 %v1154, %v1155
    %v1157 = vsub.f32 1.0, %v1156
    %v1158 = vmul.f32 %v1155, %v1157
    %v1159 = vadd.f32 %v1155, %v1158
    %vm1160 = vweird.f32 %v1154
    %vm1161 = vweird.f32 %v1155
    %vm1162 = vmor %vm1160, %vm1161
    %v1163 = vsel %vm1162, %v1155, %v1159
    %v1164 = vand.u32 2147483647, %v1154
    %vm1165 = vcmp.eq.f32.partialorder %v1164, 8.507059e+37
    %v1166 = vand.u32 %v1154, 2147483648
    %v1167 = vor.u32 1.1754944e-38, %v1166
    %v1168 = vsel %vm1165, %v1167, %v1163
    %v1169 = vmul.f32 1.0, %v1168
    %v1170 = vadd.f32 %v1148, %v840
    %1172 = vrot.lane.b32.xlu0 %v1170, 64
    %v1173 = vpop.permute.xlu0 %1172
    %v1175 = vmul.f32 %v1169, %v1173
    %1177 = vrot.lane.b32.xlu0 %v1175, 64
    %v1178 = vpop.permute.xlu0 %1177
    %v1180 = vadd.f32 %v784, %v1178
    %v1181 = vtanh.pop %v1180
    %v1182 = vsub.f32 1.0, %v1169
    %1184 = vrot.lane.b32.xlu0 %v1181, 96
    %v1185 = vpop.permute.xlu0 %1184
    %v1187 = vmul.f32 %v1182, %v1185
    %v1188 = vmul.f32 %v1169, %v1124
    %v1189 = vadd.f32 %v1187, %v1188
    %1191 = vrot.lane.b32.xlu0 %v1189, 96
    %v1192 = vpop.permute.xlu0 %1191
    %v1193 = vsel %vm160, %v1192, 0
    %1195 = vmatpush.msra.mxu0 0.0
    %1196 = vmatpush.msra.mxu0 0.0
    %1197 = vmatpush.msra.mxu0 0.0
    %1198 = vmatpush.msra.mxu0 0.0
    %1199 = vmatpush.msra.mxu0 0.0
    %1200 = vmatpush.msra.mxu0 0.0
    %1201 = vmatpush.msra.mxu0 0.0
    %1202 = vmatpush.msra.mxu0 0.0
    %1203 = vmatpush.msra.mxu0 0.0
    %1204 = vmatpush.msra.mxu0 0.0
    %1205 = vmatpush.msra.mxu0 0.0
    %1206 = vmatpush.msra.mxu0 0.0
    %1207 = vmatpush.msra.mxu0 %v714
    %1208 = vmatpush.msra.mxu0 %v713
    %1209 = vmatpush.msra.mxu0 %v712
    %1210 = vmatpush.msra.mxu0 %v711
    %1211 = vmatmul.f32.gmra.mxu0 %v1193
    %v1212 = vpop.f32.mrf.mxu0
    %v1213 = vadd.f32 0.0, %v1212
    %1214 = vdwg.mxu0
    %v1215 = vadd.f32 %v787, %v1213
    %v1216 = vxor.u32 %v1215, 2147483648
    %v1217 = vmul.f32 %v1216, 1.442695
    %v1218 = vpow.pop %v1217
    %v1219 = vadd.f32 %v1218, 1.0
    %v1220 = vrcp.pop %v1219
    %v1221 = vmul.f32 %v1219, %v1220
    %v1222 = vsub.f32 1.0, %v1221
    %v1223 = vmul.f32 %v1220, %v1222
    %v1224 = vadd.f32 %v1220, %v1223
    %vm1225 = vweird.f32 %v1219
    %vm1226 = vweird.f32 %v1220
    %vm1227 = vmor %vm1225, %vm1226
    %v1228 = vsel %vm1227, %v1220, %v1224
    %v1229 = vand.u32 2147483647, %v1219
    %vm1230 = vcmp.eq.f32.partialorder %v1229, 8.507059e+37
    %v1231 = vand.u32 %v1219, 2147483648
    %v1232 = vor.u32 1.1754944e-38, %v1231
    %v1233 = vsel %vm1230, %v1232, %v1228
    %v1234 = vmul.f32 1.0, %v1233
    %v1235 = vadd.f32 %v1213, %v840
    %1237 = vrot.lane.b32.xlu0 %v1235, 64
    %v1238 = vpop.permute.xlu0 %1237
    %v1240 = vmul.f32 %v1234, %v1238
    %1242 = vrot.lane.b32.xlu0 %v1240, 64
    %v1243 = vpop.permute.xlu0 %1242
    %v1245 = vadd.f32 %v787, %v1243
    %v1246 = vtanh.pop %v1245
    %v1247 = vsub.f32 1.0, %v1234
    %1249 = vrot.lane.b32.xlu0 %v1246, 96
    %v1250 = vpop.permute.xlu0 %1249
    %v1252 = vmul.f32 %v1247, %v1250
    %v1253 = vmul.f32 %v1234, %v1189
    %v1254 = vadd.f32 %v1252, %v1253
    %1256 = vrot.lane.b32.xlu0 %v1254, 96
    %v1257 = vpop.permute.xlu0 %1256
    %v1258 = vsel %vm160, %v1257, 0
    %1260 = vmatpush.msra.mxu0 0.0
    %1261 = vmatpush.msra.mxu0 0.0
    %1262 = vmatpush.msra.mxu0 0.0
    %1263 = vmatpush.msra.mxu0 0.0
    %1264 = vmatpush.msra.mxu0 0.0
    %1265 = vmatpush.msra.mxu0 0.0
    %1266 = vmatpush.msra.mxu0 0.0
    %1267 = vmatpush.msra.mxu0 0.0
    %1268 = vmatpush.msra.mxu0 0.0
    %1269 = vmatpush.msra.mxu0 0.0
    %1270 = vmatpush.msra.mxu0 0.0
    %1271 = vmatpush.msra.mxu0 0.0
    %1272 = vmatpush.msra.mxu0 %v714
    %1273 = vmatpush.msra.mxu0 %v713
    %1274 = vmatpush.msra.mxu0 %v712
    %1275 = vmatpush.msra.mxu0 %v711
    %1276 = vmatmul.f32.gmra.mxu0 %v1258
    %v1277 = vpop.f32.mrf.mxu0
    %v1278 = vadd.f32 0.0, %v1277
    %1279 = vdwg.mxu0
    %v1280 = vadd.f32 %v790, %v1278
    %v1281 = vxor.u32 %v1280, 2147483648
    %v1282 = vmul.f32 %v1281, 1.442695
    %v1283 = vpow.pop %v1282
    %v1284 = vadd.f32 %v1283, 1.0
    %v1285 = vrcp.pop %v1284
    %v1286 = vmul.f32 %v1284, %v1285
    %v1287 = vsub.f32 1.0, %v1286
    %v1288 = vmul.f32 %v1285, %v1287
    %v1289 = vadd.f32 %v1285, %v1288
    %vm1290 = vweird.f32 %v1284
    %vm1291 = vweird.f32 %v1285
    %vm1292 = vmor %vm1290, %vm1291
    %v1293 = vsel %vm1292, %v1285, %v1289
    %v1294 = vand.u32 2147483647, %v1284
    %vm1295 = vcmp.eq.f32.partialorder %v1294, 8.507059e+37
    %v1296 = vand.u32 %v1284, 2147483648
    %v1297 = vor.u32 1.1754944e-38, %v1296
    %v1298 = vsel %vm1295, %v1297, %v1293
    %v1299 = vmul.f32 1.0, %v1298
    %v1300 = vadd.f32 %v1278, %v840
    %1302 = vrot.lane.b32.xlu0 %v1300, 64
    %v1303 = vpop.permute.xlu0 %1302
    %v1305 = vmul.f32 %v1299, %v1303
    %1307 = vrot.lane.b32.xlu0 %v1305, 64
    %v1308 = vpop.permute.xlu0 %1307
    %v1310 = vadd.f32 %v790, %v1308
    %v1311 = vtanh.pop %v1310
    %v1312 = vsub.f32 1.0, %v1299
    %1314 = vrot.lane.b32.xlu0 %v1311, 96
    %v1315 = vpop.permute.xlu0 %1314
    %v1317 = vmul.f32 %v1312, %v1315
    %v1318 = vmul.f32 %v1299, %v1254
    %v1319 = vadd.f32 %v1317, %v1318
    %v1320 = vld [vmem:[%s10] sm:$0xff]
    %v1321 = vld [vmem:[%s10 + $0x8] sm:$0xff]
    %v1322 = vld [vmem:[%s10 + $0x10] sm:$0xff]
    %v1323 = vld [vmem:[%s10 + $0x18] sm:$0xff]
    %v1324 = vld [vmem:[%s11] sm:$0x1]
    %v1326 = vperm.slane %v1324, 0
    %1329 = vrot.lane.b32.xlu0 %v1319, 96
    %v1330 = vpop.permute.xlu0 %1329
    %v1331 = vsel %vm160, %v1330, 0
    %1333 = vmatpush.msra.mxu0 0.0
    %1334 = vmatpush.msra.mxu0 0.0
    %1335 = vmatpush.msra.mxu0 0.0
    %1336 = vmatpush.msra.mxu0 0.0
    %1337 = vmatpush.msra.mxu0 0.0
    %1338 = vmatpush.msra.mxu0 0.0
    %1339 = vmatpush.msra.mxu0 0.0
    %1340 = vmatpush.msra.mxu0 0.0
    %1341 = vmatpush.msra.mxu0 0.0
    %1342 = vmatpush.msra.mxu0 0.0
    %1343 = vmatpush.msra.mxu0 0.0
    %1344 = vmatpush.msra.mxu0 0.0
    %1345 = vmatpush.msra.mxu0 %v1323
    %1346 = vmatpush.msra.mxu0 %v1322
    %1347 = vmatpush.msra.mxu0 %v1321
    %1348 = vmatpush.msra.mxu0 %v1320
    %1349 = vmatmul.f32.gmra.mxu0 %v1331
    %v1350 = vpop.f32.mrf.mxu0
    %v1351 = vadd.f32 %v1326, %v1350
    %1352 = vdwg.mxu0
    %vm1353 = vcmask 64512
    %1354 = vst.msk [vmem:[#allocation8] sm:$0xff] %vm1353, %v1351
    // Predicated region
    $region58: #{tpu_custom_call.1} parent=1 // pred_check
      _
    $region59: #{tpu_custom_call.1} parent=1 // pred_check_branch
      %1356 = sbr.rel (0) target = $region61
    $region60: #{tpu_custom_call.1} parent=1 // pred_region
      %1358 = vsyncadd [#allocation5], 0
      %s1360 = sshll.u32 [#allocation8], 4
      %s1361 = int_to_ptr.vmem [resolvable:$true] %s1360
      %s1362 = sshll.u32 %s12, 4
      %s1363 = int_to_ptr.hbm [resolvable:$true] %s1362
      %1365 = dma.vmem_to_hbm [thread:$0]  %s1361, 128, %s1363, [#allocation5]
    $region61: #{tpu_custom_call.1} parent=1 // pred_fallthru
      _
    // Predicated region
    $region62: #{tpu_custom_call.1} parent=1 // pred_check
      _
    $region63: #{tpu_custom_call.1} parent=1 // pred_check_branch
      %1367 = sbr.rel (0) target = $region65
    $region64: #{tpu_custom_call.1} parent=1 // pred_region
      %1369 = dma.done [#allocation5], 128
    $region65: #{tpu_custom_call.1} parent=1 // pred_fallthru
      _
    %1370 = vsyncpa [#allocation4], 1
    %1371 = vsyncpa [#allocation7], 1
    %1372 = vsyncpa [#allocation5], 1

</llo_original>
